<compile_context>
chip_gen: v5e
topology: v5e:2x2
jax: 0.10.0
libtpu: 0.0.40
codegen_flags: <defaults>
</compile_context>

<pallas_src>
import functools

import jax
import jax.numpy as jnp
from jax import lax
from jax.experimental import pallas as pl
from jax.experimental.pallas import tpu as pltpu


def _focal_ssd_kernel(confs_ref, labels_ref, bbox_ref, gtbox_ref, anchors_ref,
                      alphas_ref, cls_ref, reg_ref, npos_ref,
                      cls_acc, reg_acc, npos_acc,
                      *, gamma, scale_xy, scale_wh):
    a_idx = pl.program_id(1)
    a_last = pl.num_programs(1) - 1

    @pl.when(a_idx == 0)
    def _():
        cls_acc[...] = jnp.zeros_like(cls_acc)
        reg_acc[...] = jnp.zeros_like(reg_acc)
        npos_acc[...] = jnp.zeros_like(npos_acc)

    confs = confs_ref[...].astype(jnp.float32)           # (1, C, TA)
    labels = labels_ref[...]                             # (1, 1, TA) int32

    # ---- focal classification loss (log_softmax over the class axis) -----
    m = jnp.max(confs, axis=1, keepdims=True)            # (1, 1, TA)
    z = confs - m
    lse = jnp.log(jnp.sum(jnp.exp(z), axis=1, keepdims=True))   # (1, 1, TA)
    cls_iota = lax.broadcasted_iota(jnp.int32, confs.shape, 1)
    onehot = cls_iota == labels                          # (1, C, TA)
    zt = jnp.sum(jnp.where(onehot, z, 0.0), axis=1)      # (1, TA)
    logpt = zt - lse[:, 0, :]                            # (1, TA)
    pt = jnp.exp(logpt)
    at = jnp.sum(jnp.where(onehot, alphas_ref[...].astype(jnp.float32), 0.0),
                 axis=1)                                 # (1, TA)

    omp = jnp.maximum(1.0 - pt, 0.0)
    g = float(gamma)
    if g == 0.0:
        focal_w = jnp.ones_like(omp)
    elif g.is_integer() and 1.0 <= g <= 8.0:
        focal_w = omp
        for _ in range(int(g) - 1):
            focal_w = focal_w * omp                      # VALU, no EUP pow
    else:
        focal_w = jnp.power(omp, g)
    cls_acc[...] += -(focal_w * logpt * at)              # (1, TA), VALU only

    # ---- smooth-L1 regression loss on positive anchors -------------------
    anchors = anchors_ref[0].astype(jnp.float32)         # (4, TA)
    gtb = gtbox_ref[0].astype(jnp.float32)               # (4, TA)
    bbox = bbox_ref[0].astype(jnp.float32)               # (4, TA)
    a_wh = anchors[2:]
    gxy = scale_xy * (gtb[:2] - anchors[:2]) / a_wh
    gwh = scale_wh * jnp.log(gtb[2:] / a_wh)
    gt_loc = jnp.concatenate([gxy, gwh], axis=0)         # (4, TA)
    diff = bbox - gt_loc
    ad = jnp.abs(diff)
    sl1 = jnp.where(ad < 1.0, 0.5 * ad * ad, ad - 0.5)   # SmoothL1, beta=1.0
    pos = labels[0] > 0                                  # (1, TA)
    reg_acc[...] += jnp.where(pos, sl1, 0.0)             # (4, TA)
    npos_acc[...] += pos.astype(jnp.float32)             # (1, TA)

    # ---- once per batch row: cross-lane reduce + tiny writeback -----------
    @pl.when(a_idx == a_last)
    def _():
        cls_ref[...] = jnp.sum(cls_acc[...]).reshape(1, 1, 1)
        reg_ref[...] = jnp.sum(reg_acc[...]).reshape(1, 1, 1)
        npos_ref[...] = jnp.sum(npos_acc[...]).reshape(1, 1, 1)


def _pick_tile_anchors(num_anchors, num_classes, vmem_budget_bytes=8 << 20):
    """Largest multiple of 128 dividing NA that fits a conservative VMEM budget."""
    c_pad = ((num_classes + 7) // 8) * 8
    # f32 words per anchor resident in VMEM: double-buffered inputs + scratch.
    words = 2 * (c_pad + 8 + 8 + 8 + 8) + (8 + 8 + 8)
    cap = max(128, (vmem_budget_bytes // (4 * words)) // 128 * 128)
    best = None
    t = 128
    while t <= min(num_anchors, cap):
        if num_anchors % t == 0:
            best = t
        t += 128
    if best is None:
        # TODO(synk): pad the anchor axis to a multiple of 128 (with masking)
        # to support anchor counts like 8732 that are not 128-aligned.
        raise ValueError("num_anchors must be a multiple of 128")
    return best


def focal_loss_forward(bbox_delta, confs, gt_bbox, gt_labels, *,
                       anchors, alphas, gamma=2.0,
                       scale_xy=10.0, scale_wh=5.0, tile_anchors=None):
    """Mirrors FocalLoss.forward. Returns (total_loss, to_log dict)."""
    B, C, NA = confs.shape
    if tile_anchors is None:
        tile_anchors = _pick_tile_anchors(NA, C)
    assert NA % tile_anchors == 0
    TA = tile_anchors

    # The module API gives gt_bbox as [B, NA, 4]; one transpose to the
    # anchors-last layout (same as the PyTorch forward's transpose(1, 2)).
    gt_bbox_t = jnp.transpose(gt_bbox, (0, 2, 1))        # [B, 4, NA]
    labels3 = gt_labels.astype(jnp.int32)[:, None, :]    # [B, 1, NA]
    alphas3 = jnp.asarray(alphas, jnp.float32).reshape(1, C, 1)
    anchors3 = jnp.asarray(anchors)                      # [1, 4, NA], keep dtype

    kernel = functools.partial(_focal_ssd_kernel, gamma=gamma,
                               scale_xy=scale_xy, scale_wh=scale_wh)

    bytes_accessed = int(
        confs.size * confs.dtype.itemsize
        + bbox_delta.size * bbox_delta.dtype.itemsize
        + gt_bbox.size * gt_bbox.dtype.itemsize
        + labels3.size * 4
        + B * anchors3.size * anchors3.dtype.itemsize
        + alphas3.size * 4 + 3 * B * 4)
    cost = pl.CostEstimate(flops=int(B * NA * (8 * C + 48)),
                           transcendentals=int(B * NA * (C + 4)),
                           bytes_accessed=bytes_accessed)

    out_sds = jax.ShapeDtypeStruct((B, 1, 1), jnp.float32)
    out_block = pl.BlockSpec((1, 1, 1), lambda b, a: (b, 0, 0))

    cls_p, reg_p, npos_p = pl.pallas_call(
        kernel,
        out_shape=(out_sds, out_sds, out_sds),
        grid_spec=pltpu.PrefetchScalarGridSpec(
            num_scalar_prefetch=0,
            grid=(B, NA // TA),
            in_specs=[
                pl.BlockSpec((1, C, TA), lambda b, a: (b, 0, a)),
                pl.BlockSpec((1, 1, TA), lambda b, a: (b, 0, a)),
                pl.BlockSpec((1, 4, TA), lambda b, a: (b, 0, a)),
                pl.BlockSpec((1, 4, TA), lambda b, a: (b, 0, a)),
                pl.BlockSpec((1, 4, TA), lambda b, a: (0, 0, a)),
                pl.BlockSpec((1, C, 1), lambda b, a: (0, 0, 0)),
            ],
            out_specs=(out_block, out_block, out_block),
            scratch_shapes=[pltpu.VMEM((1, TA), jnp.float32),
                            pltpu.VMEM((4, TA), jnp.float32),
                            pltpu.VMEM((1, TA), jnp.float32)]),
        compiler_params=pltpu.CompilerParams(
            dimension_semantics=("parallel", "arbitrary"),
            vmem_limit_bytes=32 * 1024 * 1024),
        cost_estimate=cost,
    )(confs, labels3, bbox_delta, gt_bbox_t, anchors3, alphas3)

    num_pos = jnp.sum(npos_p)
    classification_loss = jnp.sum(cls_p)
    regression_loss = jnp.sum(reg_p)
    # NOTE: matches PyTorch/reference behavior: inf/NaN when num_pos == 0.
    total_loss = regression_loss / num_pos + classification_loss / num_pos
    to_log = dict(regression_loss=regression_loss / num_pos,
                  classification_loss=classification_loss / num_pos,
                  total_loss=total_loss)
    return total_loss, to_log


def _reference(bbox_delta, confs, gt_bbox, gt_labels, anchors, alphas,
               gamma, scale_xy, scale_wh):
    """Pure-JAX reference matching the PyTorch forward."""
    B, C, NA = confs.shape
    x = jnp.transpose(confs, (0, 2, 1)).reshape(-1, C)
    t = gt_labels.reshape(-1)
    logp = jax.nn.log_softmax(x, axis=1)
    logpt = jnp.take_along_axis(logp, t[:, None], axis=1)[:, 0]
    pt = jnp.exp(logpt)
    at = alphas[t]
    cls = jnp.sum(-((1.0 - pt) ** gamma) * logpt * at)

    gtb = jnp.transpose(gt_bbox, (0, 2, 1))
    gxy = scale_xy * (gtb[:, :2] - anchors[:, :2]) / anchors[:, 2:]
    gwh = scale_wh * jnp.log(gtb[:, 2:] / anchors[:, 2:])
    gt_loc = jnp.concatenate([gxy, gwh], axis=1)
    diff = bbox_delta - gt_loc
    ad = jnp.abs(diff)
    sl1 = jnp.where(ad < 1.0, 0.5 * ad * ad, ad - 0.5)
    pos = (gt_labels > 0)[:, None, :]
    reg = jnp.sum(jnp.where(pos, sl1, 0.0))
    num_pos = jnp.sum((gt_labels > 0).astype(jnp.float32))
    return reg / num_pos + cls / num_pos


if __name__ == "__main__":
    B, C, NA = 2, 8, 1024  # batch, num_classes, num_anchors (small test sizes)
    gamma = 2.0
    scale_xy, scale_wh = 10.0, 5.0  # = 1/0.1, 1/0.2 (typical SSD anchor scales)

    key = jax.random.PRNGKey(0)
    k1, k2, k3, k4, k5 = jax.random.split(key, 5)
    bbox_delta = jax.random.normal(k1, (B, 4, NA), jnp.float32)
    confs = jax.random.normal(k2, (B, C, NA), jnp.float32)
    gt_xy = jax.random.uniform(k3, (B, NA, 2), jnp.float32, 0.0, 1.0)
    gt_wh = jax.random.uniform(k4, (B, NA, 2), jnp.float32, 0.05, 0.5)
    gt_bbox = jnp.concatenate([gt_xy, gt_wh], axis=-1)     # [B, NA, 4]
    gt_labels = jax.random.randint(k5, (B, NA), 0, C)      # [B, NA]

    # Deterministic "module parameters" (anchors buffer + per-class alphas).
    ka, kb = jax.random.split(jax.random.PRNGKey(42))
    anc_xy = jax.random.uniform(ka, (1, 2, NA), jnp.float32, 0.0, 1.0)
    anc_wh = jax.random.uniform(kb, (1, 2, NA), jnp.float32, 0.1, 0.4)
    anchors = jnp.concatenate([anc_xy, anc_wh], axis=1)    # [1, 4, NA]
    alphas = jnp.array([0.1] + [1.0] * (C - 1), jnp.float32)

    total_loss, to_log = focal_loss_forward(
        bbox_delta, confs, gt_bbox, gt_labels,
        anchors=anchors, alphas=alphas, gamma=gamma,
        scale_xy=scale_xy, scale_wh=scale_wh)
    jax.block_until_ready(total_loss)

    ref = _reference(bbox_delta, confs, gt_bbox, gt_labels, anchors, alphas,
                     gamma, scale_xy, scale_wh)
    assert jnp.allclose(total_loss, ref, rtol=2e-3, atol=2e-3), (total_loss, ref)

    print("KERNEL_OK")
</pallas_src>

<mosaic_0001>
module attributes {stable_mosaic.version = 11 : i64} {
  func.func @_focal_ssd_kernel(%arg0: i32, %arg1: i32, %arg2: memref<1x8x1024xf32, #tpu.memory_space<vmem>>, %arg3: memref<1x1x1024xi32, #tpu.memory_space<vmem>>, %arg4: memref<1x4x1024xf32, #tpu.memory_space<vmem>>, %arg5: memref<1x4x1024xf32, #tpu.memory_space<vmem>>, %arg6: memref<1x4x1024xf32, #tpu.memory_space<vmem>>, %arg7: memref<1x8x1xf32, #tpu.memory_space<vmem>>, %arg8: memref<1x1x1xf32, #tpu.memory_space<vmem>>, %arg9: memref<1x1x1xf32, #tpu.memory_space<vmem>>, %arg10: memref<1x1x1xf32, #tpu.memory_space<vmem>>, %arg11: memref<1x1024xf32, #tpu.memory_space<vmem>>, %arg12: memref<4x1024xf32, #tpu.memory_space<vmem>>, %arg13: memref<1x1024xf32, #tpu.memory_space<vmem>>) attributes {dimension_semantics = [#tpu.dimension_semantics<parallel>, #tpu.dimension_semantics<arbitrary>], iteration_bounds = array<i64: 2, 1>, scalar_prefetch = 0 : i64, scratch_operands = 3 : i64, tpu.core_type = #tpu.core_type<tc>, window_params = [{transform_indices = @transform_0, window_bounds = array<i64: 1, 8, 1024>}, {transform_indices = @transform_1, window_bounds = array<i64: 1, 1, 1024>}, {transform_indices = @transform_2, window_bounds = array<i64: 1, 4, 1024>}, {transform_indices = @transform_3, window_bounds = array<i64: 1, 4, 1024>}, {transform_indices = @transform_4, window_bounds = array<i64: 1, 4, 1024>}, {pipeline_mode = #tpu.pipeline_mode<synchronous>, transform_indices = @transform_5, window_bounds = array<i64: 1, 8, 1>}, {transform_indices = @transform_6, window_bounds = array<i64: 1, 1, 1>}, {transform_indices = @transform_7, window_bounds = array<i64: 1, 1, 1>}, {transform_indices = @transform_8, window_bounds = array<i64: 1, 1, 1>}]} {
    %c0_i32 = arith.constant 0 : i32
    %0 = arith.cmpi eq, %arg1, %c0_i32 : i32
    %1 = arith.extui %0 : i1 to i32
    %c0_i32_0 = arith.constant 0 : i32
    %2 = arith.cmpi ne, %1, %c0_i32_0 : i32
    scf.if %2 {
      %cst_47 = arith.constant 0.000000e+00 : f32
      %87 = vector.broadcast %cst_47 : f32 to vector<1x1024xf32>
      %c0_48 = arith.constant 0 : index
      %c0_49 = arith.constant 0 : index
      %88 = vector.load %arg11[%c0_48, %c0_49] : memref<1x1024xf32, #tpu.memory_space<vmem>>, vector<1x1024xf32>
      tpu.vector_store %arg11[%c0_48, %c0_49], %87 {strides = array<i32>} : memref<1x1024xf32, #tpu.memory_space<vmem>>, vector<1x1024xf32>,
      %cst_50 = arith.constant 0.000000e+00 : f32
      %89 = vector.broadcast %cst_50 : f32 to vector<4x1024xf32>
      %c0_51 = arith.constant 0 : index
      %c0_52 = arith.constant 0 : index
      %90 = vector.load %arg12[%c0_51, %c0_52] : memref<4x1024xf32, #tpu.memory_space<vmem>>, vector<4x1024xf32>
      tpu.vector_store %arg12[%c0_51, %c0_52], %89 {strides = array<i32>} : memref<4x1024xf32, #tpu.memory_space<vmem>>, vector<4x1024xf32>,
      %cst_53 = arith.constant 0.000000e+00 : f32
      %91 = vector.broadcast %cst_53 : f32 to vector<1x1024xf32>
      %c0_54 = arith.constant 0 : index
      %c0_55 = arith.constant 0 : index
      %92 = vector.load %arg13[%c0_54, %c0_55] : memref<1x1024xf32, #tpu.memory_space<vmem>>, vector<1x1024xf32>
      tpu.vector_store %arg13[%c0_54, %c0_55], %91 {strides = array<i32>} : memref<1x1024xf32, #tpu.memory_space<vmem>>, vector<1x1024xf32>,
    } else {
    }
    %c0 = arith.constant 0 : index
    %c0_1 = arith.constant 0 : index
    %c0_2 = arith.constant 0 : index
    %3 = vector.load %arg2[%c0, %c0_1, %c0_2] : memref<1x8x1024xf32, #tpu.memory_space<vmem>>, vector<1x8x1024xf32>
    %c0_3 = arith.constant 0 : index
    %c0_4 = arith.constant 0 : index
    %c0_5 = arith.constant 0 : index
    %4 = vector.load %arg3[%c0_3, %c0_4, %c0_5] : memref<1x1x1024xi32, #tpu.memory_space<vmem>>, vector<1x1x1024xi32>
    %cst = arith.constant dense<0xFF800000> : vector<1x1024xf32>
    %5 = vector.multi_reduction <maximumf>, %3, %cst [1] : vector<1x8x1024xf32> to vector<1x1024xf32>
    %6 = vector.shape_cast %5 : vector<1x1024xf32> to vector<1x1x1024xf32>
    %7 = vector.broadcast %6 : vector<1x1x1024xf32> to vector<1x8x1024xf32>
    %8 = arith.subf %3, %7 : vector<1x8x1024xf32>
    %9 = math.exp %8 : vector<1x8x1024xf32>
    %cst_6 = arith.constant dense<0.000000e+00> : vector<1x1024xf32>
    %10 = vector.multi_reduction <add>, %9, %cst_6 [1] : vector<1x8x1024xf32> to vector<1x1024xf32>
    %11 = vector.shape_cast %10 : vector<1x1024xf32> to vector<1x1x1024xf32>
    %12 = math.log %11 : vector<1x1x1024xf32>
    %13 = tpu.iota {dimensions = array<i32: 1>} : vector<1x8x1024xi32>
    %14 = vector.broadcast %4 : vector<1x1x1024xi32> to vector<1x8x1024xi32>
    %15 = arith.cmpi eq, %13, %14 : vector<1x8x1024xi32>
    %cst_7 = arith.constant 0.000000e+00 : f32
    %16 = vector.broadcast %cst_7 : f32 to vector<1x8x1024xf32>
    %17 = arith.select %15, %8, %16 : vector<1x8x1024xi1>, vector<1x8x1024xf32>
    %cst_8 = arith.constant dense<0.000000e+00> : vector<1x1024xf32>
    %18 = vector.multi_reduction <add>, %17, %cst_8 [1] : vector<1x8x1024xf32> to vector<1x1024xf32>
    %19 = vector.shape_cast %12 : vector<1x1x1024xf32> to vector<1x1024xf32>
    %20 = arith.subf %18, %19 : vector<1x1024xf32>
    %21 = math.exp %20 : vector<1x1024xf32>
    %c0_9 = arith.constant 0 : index
    %c0_10 = arith.constant 0 : index
    %c0_11 = arith.constant 0 : index
    %22 = vector.load %arg7[%c0_9, %c0_10, %c0_11] : memref<1x8x1xf32, #tpu.memory_space<vmem>>, vector<1x8x1xf32>
    %cst_12 = arith.constant 0.000000e+00 : f32
    %23 = vector.shape_cast %22 : vector<1x8x1xf32> to vector<1x8x1xf32>
    %24 = vector.broadcast %23 : vector<1x8x1xf32> to vector<1x8x1024xf32>
    %25 = vector.broadcast %cst_12 : f32 to vector<1x8x1024xf32>
    %26 = arith.select %15, %24, %25 : vector<1x8x1024xi1>, vector<1x8x1024xf32>
    %cst_13 = arith.constant dense<0.000000e+00> : vector<1x1024xf32>
    %27 = vector.multi_reduction <add>, %26, %cst_13 [1] : vector<1x8x1024xf32> to vector<1x1024xf32>
    %cst_14 = arith.constant 1.000000e+00 : f32
    %28 = vector.broadcast %cst_14 : f32 to vector<1x1024xf32>
    %29 = arith.subf %28, %21 : vector<1x1024xf32>
    %cst_15 = arith.constant 0.000000e+00 : f32
    %30 = vector.broadcast %cst_15 : f32 to vector<1x1024xf32>
    %31 = arith.maximumf %29, %30 : vector<1x1024xf32>
    %32 = arith.mulf %31, %31 : vector<1x1024xf32>
    %c0_16 = arith.constant 0 : index
    %c0_17 = arith.constant 0 : index
    %33 = vector.load %arg11[%c0_16, %c0_17] : memref<1x1024xf32, #tpu.memory_space<vmem>>, vector<1x1024xf32>
    %34 = arith.mulf %32, %20 : vector<1x1024xf32>
    %35 = arith.mulf %34, %27 : vector<1x1024xf32>
    %cst_18 = arith.constant 0.000000e+00 : f32
    %36 = vector.broadcast %cst_18 : f32 to vector<1x1024xf32>
    %37 = arith.subf %36, %35 : vector<1x1024xf32>
    %38 = arith.addf %33, %37 : vector<1x1024xf32>
    %c0_19 = arith.constant 0 : index
    %c0_20 = arith.constant 0 : index
    %39 = vector.load %arg11[%c0_19, %c0_20] : memref<1x1024xf32, #tpu.memory_space<vmem>>, vector<1x1024xf32>
    tpu.vector_store %arg11[%c0_19, %c0_20], %38 {strides = array<i32>} : memref<1x1024xf32, #tpu.memory_space<vmem>>, vector<1x1024xf32>,
    %c0_21 = arith.constant 0 : index
    %c0_22 = arith.constant 0 : index
    %c0_23 = arith.constant 0 : index
    %40 = vector.load %arg6[%c0_21, %c0_22, %c0_23] : memref<1x4x1024xf32, #tpu.memory_space<vmem>>, vector<1x4x1024xf32>
    %41 = vector.shape_cast %40 : vector<1x4x1024xf32> to vector<4x1024xf32>
    %c0_24 = arith.constant 0 : index
    %c0_25 = arith.constant 0 : index
    %c0_26 = arith.constant 0 : index
    %42 = vector.load %arg5[%c0_24, %c0_25, %c0_26] : memref<1x4x1024xf32, #tpu.memory_space<vmem>>, vector<1x4x1024xf32>
    %43 = vector.shape_cast %42 : vector<1x4x1024xf32> to vector<4x1024xf32>
    %c0_27 = arith.constant 0 : index
    %c0_28 = arith.constant 0 : index
    %c0_29 = arith.constant 0 : index
    %44 = vector.load %arg4[%c0_27, %c0_28, %c0_29] : memref<1x4x1024xf32, #tpu.memory_space<vmem>>, vector<1x4x1024xf32>
    %45 = vector.shape_cast %44 : vector<1x4x1024xf32> to vector<4x1024xf32>
    %46 = vector.extract_strided_slice %41 {offsets = [2, 0], sizes = [2, 1024], strides = [1, 1]} : vector<4x1024xf32> to vector<2x1024xf32>
    %47 = vector.extract_strided_slice %43 {offsets = [0, 0], sizes = [2, 1024], strides = [1, 1]} : vector<4x1024xf32> to vector<2x1024xf32>
    %48 = vector.extract_strided_slice %41 {offsets = [0, 0], sizes = [2, 1024], strides = [1, 1]} : vector<4x1024xf32> to vector<2x1024xf32>
    %49 = arith.subf %47, %48 : vector<2x1024xf32>
    %cst_30 = arith.constant 1.000000e+01 : f32
    %50 = vector.broadcast %cst_30 : f32 to vector<2x1024xf32>
    %51 = arith.mulf %50, %49 : vector<2x1024xf32>
    %52 = arith.divf %51, %46 : vector<2x1024xf32>
    %53 = vector.extract_strided_slice %43 {offsets = [2, 0], sizes = [2, 1024], strides = [1, 1]} : vector<4x1024xf32> to vector<2x1024xf32>
    %54 = arith.divf %53, %46 : vector<2x1024xf32>
    %55 = math.log %54 : vector<2x1024xf32>
    %cst_31 = arith.constant 5.000000e+00 : f32
    %56 = vector.broadcast %cst_31 : f32 to vector<2x1024xf32>
    %57 = arith.mulf %56, %55 : vector<2x1024xf32>
    %58 = tpu.concatenate %52, %57 in 0 : vector<2x1024xf32>, vector<2x1024xf32> -> vector<4x1024xf32>
    %59 = arith.subf %45, %58 : vector<4x1024xf32>
    %60 = math.absf %59 : vector<4x1024xf32>
    %cst_32 = arith.constant 1.000000e+00 : f32
    %61 = vector.broadcast %cst_32 : f32 to vector<4x1024xf32>
    %62 = arith.cmpf olt, %60, %61 : vector<4x1024xf32>
    %cst_33 = arith.constant 5.000000e-01 : f32
    %63 = vector.broadcast %cst_33 : f32 to vector<4x1024xf32>
    %64 = arith.mulf %63, %60 : vector<4x1024xf32>
    %65 = arith.mulf %64, %60 : vector<4x1024xf32>
    %cst_34 = arith.constant 5.000000e-01 : f32
    %66 = vector.broadcast %cst_34 : f32 to vector<4x1024xf32>
    %67 = arith.subf %60, %66 : vector<4x1024xf32>
    %68 = arith.select %62, %65, %67 : vector<4x1024xi1>, vector<4x1024xf32>
    %69 = vector.shape_cast %4 : vector<1x1x1024xi32> to vector<1x1024xi32>
    %c0_i32_35 = arith.constant 0 : i32
    %70 = vector.broadcast %c0_i32_35 : i32 to vector<1x1024xi32>
    %71 = arith.cmpi sgt, %69, %70 : vector<1x1024xi32>
    %c0_36 = arith.constant 0 : index
    %c0_37 = arith.constant 0 : index
    %72 = vector.load %arg12[%c0_36, %c0_37] : memref<4x1024xf32, #tpu.memory_space<vmem>>, vector<4x1024xf32>
    %cst_38 = arith.constant 0.000000e+00 : f32
    %73 = vector.shape_cast %71 : vector<1x1024xi1> to vector<1x1024xi1>
    %74 = vector.broadcast %73 : vector<1x1024xi1> to vector<4x1024xi1>
    %75 = vector.broadcast %cst_38 : f32 to vector<4x1024xf32>
    %76 = arith.select %74, %68, %75 : vector<4x1024xi1>, vector<4x1024xf32>
    %77 = arith.addf %72, %76 : vector<4x1024xf32>
    %c0_39 = arith.constant 0 : index
    %c0_40 = arith.constant 0 : index
    %78 = vector.load %arg12[%c0_39, %c0_40] : memref<4x1024xf32, #tpu.memory_space<vmem>>, vector<4x1024xf32>
    tpu.vector_store %arg12[%c0_39, %c0_40], %77 {strides = array<i32>} : memref<4x1024xf32, #tpu.memory_space<vmem>>, vector<4x1024xf32>,
    %c0_41 = arith.constant 0 : index
    %c0_42 = arith.constant 0 : index
    %79 = vector.load %arg13[%c0_41, %c0_42] : memref<1x1024xf32, #tpu.memory_space<vmem>>, vector<1x1024xf32>
    %80 = arith.extui %71 : vector<1x1024xi1> to vector<1x1024xi32>
    %81 = arith.sitofp %80 : vector<1x1024xi32> to vector<1x1024xf32>
    %82 = arith.addf %79, %81 : vector<1x1024xf32>
    %c0_43 = arith.constant 0 : index
    %c0_44 = arith.constant 0 : index
    %83 = vector.load %arg13[%c0_43, %c0_44] : memref<1x1024xf32, #tpu.memory_space<vmem>>, vector<1x1024xf32>
    tpu.vector_store %arg13[%c0_43, %c0_44], %82 {strides = array<i32>} : memref<1x1024xf32, #tpu.memory_space<vmem>>, vector<1x1024xf32>,
    %c0_i32_45 = arith.constant 0 : i32
    %84 = arith.cmpi eq, %arg1, %c0_i32_45 : i32
    %85 = arith.extui %84 : i1 to i32
    %c0_i32_46 = arith.constant 0 : i32
    %86 = arith.cmpi ne, %85, %c0_i32_46 : i32
    scf.if %86 {
      %c0_47 = arith.constant 0 : index
      %c0_48 = arith.constant 0 : index
      %87 = vector.load %arg11[%c0_47, %c0_48] : memref<1x1024xf32, #tpu.memory_space<vmem>>, vector<1x1024xf32>
      %88 = vector.shape_cast %87 : vector<1x1024xf32> to vector<1x1x1024xf32>
      %cst_49 = arith.constant dense<0.000000e+00> : vector<1xf32>
      %89 = vector.multi_reduction <add>, %88, %cst_49 [1, 2] : vector<1x1x1024xf32> to vector<1xf32>
      %90 = vector.shape_cast %89 : vector<1xf32> to vector<1x1x1xf32>
      %91 = vector.extract %90[0, 0, 0] : f32 from vector<1x1x1xf32>
      %92 = vector.broadcast %91 : f32 to vector<1x1x1xf32>
      %c0_50 = arith.constant 0 : index
      %c0_51 = arith.constant 0 : index
      %c0_52 = arith.constant 0 : index
      %93 = vector.load %arg8[%c0_50, %c0_51, %c0_52] : memref<1x1x1xf32, #tpu.memory_space<vmem>>, vector<1x1x1xf32>
      tpu.vector_store %arg8[%c0_50, %c0_51, %c0_52], %92 {strides = array<i32>} : memref<1x1x1xf32, #tpu.memory_space<vmem>>, vector<1x1x1xf32>,
      %c0_53 = arith.constant 0 : index
      %c0_54 = arith.constant 0 : index
      %94 = vector.load %arg12[%c0_53, %c0_54] : memref<4x1024xf32, #tpu.memory_space<vmem>>, vector<4x1024xf32>
      %95 = vector.shape_cast %94 : vector<4x1024xf32> to vector<1x4x1024xf32>
      %cst_55 = arith.constant dense<0.000000e+00> : vector<1xf32>
      %96 = vector.multi_reduction <add>, %95, %cst_55 [1, 2] : vector<1x4x1024xf32> to vector<1xf32>
      %97 = vector.shape_cast %96 : vector<1xf32> to vector<1x1x1xf32>
      %98 = vector.extract %97[0, 0, 0] : f32 from vector<1x1x1xf32>
      %99 = vector.broadcast %98 : f32 to vector<1x1x1xf32>
      %c0_56 = arith.constant 0 : index
      %c0_57 = arith.constant 0 : index
      %c0_58 = arith.constant 0 : index
      %100 = vector.load %arg9[%c0_56, %c0_57, %c0_58] : memref<1x1x1xf32, #tpu.memory_space<vmem>>, vector<1x1x1xf32>
      tpu.vector_store %arg9[%c0_56, %c0_57, %c0_58], %99 {strides = array<i32>} : memref<1x1x1xf32, #tpu.memory_space<vmem>>, vector<1x1x1xf32>,
      %c0_59 = arith.constant 0 : index
      %c0_60 = arith.constant 0 : index
      %101 = vector.load %arg13[%c0_59, %c0_60] : memref<1x1024xf32, #tpu.memory_space<vmem>>, vector<1x1024xf32>
      %102 = vector.shape_cast %101 : vector<1x1024xf32> to vector<1x1x1024xf32>
      %cst_61 = arith.constant dense<0.000000e+00> : vector<1xf32>
      %103 = vector.multi_reduction <add>, %102, %cst_61 [1, 2] : vector<1x1x1024xf32> to vector<1xf32>
      %104 = vector.shape_cast %103 : vector<1xf32> to vector<1x1x1xf32>
      %105 = vector.extract %104[0, 0, 0] : f32 from vector<1x1x1xf32>
      %106 = vector.broadcast %105 : f32 to vector<1x1x1xf32>
      %c0_62 = arith.constant 0 : index
      %c0_63 = arith.constant 0 : index
      %c0_64 = arith.constant 0 : index
      %107 = vector.load %arg10[%c0_62, %c0_63, %c0_64] : memref<1x1x1xf32, #tpu.memory_space<vmem>>, vector<1x1x1xf32>
      tpu.vector_store %arg10[%c0_62, %c0_63, %c0_64], %106 {strides = array<i32>} : memref<1x1x1xf32, #tpu.memory_space<vmem>>, vector<1x1x1xf32>,
    } else {
    }
    return
  }
  func.func @transform_0(%arg0: i32, %arg1: i32) -> (i32, i32, i32) {
    %c0_i32 = arith.constant 0 : i32
    %c0_i32_0 = arith.constant 0 : i32
    return %arg0, %c0_i32, %arg1 : i32, i32, i32
  }
  func.func @transform_1(%arg0: i32, %arg1: i32) -> (i32, i32, i32) {
    %c0_i32 = arith.constant 0 : i32
    %c0_i32_0 = arith.constant 0 : i32
    return %arg0, %c0_i32, %arg1 : i32, i32, i32
  }
  func.func @transform_2(%arg0: i32, %arg1: i32) -> (i32, i32, i32) {
    %c0_i32 = arith.constant 0 : i32
    %c0_i32_0 = arith.constant 0 : i32
    return %arg0, %c0_i32, %arg1 : i32, i32, i32
  }
  func.func @transform_3(%arg0: i32, %arg1: i32) -> (i32, i32, i32) {
    %c0_i32 = arith.constant 0 : i32
    %c0_i32_0 = arith.constant 0 : i32
    return %arg0, %c0_i32, %arg1 : i32, i32, i32
  }
  func.func @transform_4(%arg0: i32, %arg1: i32) -> (i32, i32, i32) {
    %c0_i32 = arith.constant 0 : i32
    %c0_i32_0 = arith.constant 0 : i32
    %c0_i32_1 = arith.constant 0 : i32
    return %c0_i32, %c0_i32_0, %arg1 : i32, i32, i32
  }
  func.func @transform_5(%arg0: i32, %arg1: i32) -> (i32, i32, i32) {
    %c0_i32 = arith.constant 0 : i32
    %c0_i32_0 = arith.constant 0 : i32
    %c0_i32_1 = arith.constant 0 : i32
    %c0_i32_2 = arith.constant 0 : i32
    return %c0_i32, %c0_i32_0, %c0_i32_1 : i32, i32, i32
  }
  func.func @transform_6(%arg0: i32, %arg1: i32) -> (i32, i32, i32) {
    %c0_i32 = arith.constant 0 : i32
    %c0_i32_0 = arith.constant 0 : i32
    %c0_i32_1 = arith.constant 0 : i32
    return %arg0, %c0_i32, %c0_i32_0 : i32, i32, i32
  }
  func.func @transform_7(%arg0: i32, %arg1: i32) -> (i32, i32, i32) {
    %c0_i32 = arith.constant 0 : i32
    %c0_i32_0 = arith.constant 0 : i32
    %c0_i32_1 = arith.constant 0 : i32
    return %arg0, %c0_i32, %c0_i32_0 : i32, i32, i32
  }
  func.func @transform_8(%arg0: i32, %arg1: i32) -> (i32, i32, i32) {
    %c0_i32 = arith.constant 0 : i32
    %c0_i32_0 = arith.constant 0 : i32
    %c0_i32_1 = arith.constant 0 : i32
    return %arg0, %c0_i32, %c0_i32_0 : i32, i32, i32
  }
}

</mosaic_0001>

<llo_original>
// kernel: tpu_custom_call.1
$region0: #{tpu_custom_call.1}
  #allocation0 [shape = 'u32[]', space=smem, size = 0x4, offset = 0x4, fixed_abs, tag = 'smem constant byte address 0x4 - core index']
  #allocation1 [shape = 'u32[72,128]{1,0:T(1,128)}', space=vmem, size = 0x9000, scoped, tag = 'internal scratch']
  #allocation2 [shape = 'f32[1,1024]{1,0:T(1,128)}', space=vmem, size = 0x1000, scoped, tag = 'scratch operand']
  #allocation3 [shape = 'f32[4,1024]{1,0:T(4,128)}', space=vmem, size = 0x4000, scoped, tag = 'scratch operand']
  #allocation4 [shape = 'f32[1,1024]{1,0:T(1,128)}', space=vmem, size = 0x1000, scoped, tag = 'scratch operand']
  %s0 = inlined_call_operand.hbm [shape: f32[2,8,1024], index: 0, kind: input, shape index: {}]
  %s1 = inlined_call_operand.hbm [shape: s32[2,1,1024], index: 1, kind: input, shape index: {}]
  %s2 = inlined_call_operand.hbm [shape: f32[2,4,1024], index: 2, kind: input, shape index: {}]
  %s3 = inlined_call_operand.hbm [shape: f32[2,4,1024], index: 3, kind: input, shape index: {}]
  %s4 = inlined_call_operand.hbm [shape: f32[1,4,1024], index: 4, kind: input, shape index: {}]
  %s5 = inlined_call_operand.vmem [shape: f32[1,8,1], index: 5, kind: input, shape index: {}]
  %s6 = inlined_call_operand.vmem [shape: f32[2,1,1], index: 6, kind: output, shape index: {0}]
  %s7 = inlined_call_operand.vmem [shape: f32[2,1,1], index: 7, kind: output, shape index: {1}]
  %s8 = inlined_call_operand.vmem [shape: f32[2,1,1], index: 8, kind: output, shape index: {2}]
  %9 = xla_tuple %s6, %s7, %s8
  %s10 = sld [smem:[#allocation0]]
  $region101: #{tpu_custom_call.1} parent=0
    _
  %s12 = ssub.s32 1, %s10
  %s13 = scalar_select 0, %s12, %s10
  $region1: #{tpu_custom_call.1} parent=0
    #allocation5 [shape = 'u8[65536]{0}', space=vmem, size = 0x10000, scoped, tag = 'input window, operand 0']
    #allocation6 [shape = 's32[2]{0}', space=sflag, size = 0x8, scoped, tag = 'scoped memory for tpu_custom_call.1']
    #allocation7 [shape = 'u8[8192]{0}', space=vmem, size = 0x2000, scoped, tag = 'input window, operand 1']
    #allocation8 [shape = 's32[2]{0}', space=sflag, size = 0x8, scoped, tag = 'scoped memory for tpu_custom_call.1']
    #allocation9 [shape = 'u8[32768]{0}', space=vmem, size = 0x8000, scoped, tag = 'input window, operand 2']
    #allocation10 [shape = 'u8[32768]{0}', space=vmem, size = 0x8000, scoped, tag = 'input window, operand 3']
    #allocation11 [shape = 's32[2]{0}', space=sflag, size = 0x8, scoped, tag = 'scoped memory for tpu_custom_call.1']
    #allocation12 [shape = 'u8[16384]{0}', space=vmem, size = 0x4000, scoped, tag = 'input window, operand 4, single buffered']
    %14 = vsyncpa [#allocation6], 0
    %s15 = scalar_lea.sflag [#allocation6], 1
    %16 = vsyncpa %s15, 0
    %17 = vsyncpa [#allocation8], 0
    %s18 = scalar_lea.sflag [#allocation8], 1
    %19 = vsyncpa %s18, 0
    %20 = vsyncpa [#allocation11], 0
    %s21 = scalar_lea.sflag [#allocation11], 1
    %22 = vsyncpa %s21, 0
    loop: start=0, step=1, limit=4
    $region2: #{tpu_custom_call.1} parent=1 // loop_pre_header
      _
    $region3: #{tpu_custom_call.1} parent=1 // loop_header
      %s24 = sphi 0, %s28
      %p25 = scmp.ge.s32.totalorder %s24, 4
      %s31 = sphi 0, %s43
      %s32 = sphi 0, %s39
      %s33 = sphi 0, %s31
      %s34 = sphi 0, %s32
      %s35 = sphi 0, %s33
      %s36 = sphi 0, %s34
      %s48 = sphi 0, %s50
      %s51 = sphi 0, %s48
      %s52 = sphi 0, %s51
      %s68 = sphi 0, %s52
      %s76 = sphi 0, %s78
      %s79 = sphi 0, %s76
      %s80 = sphi 0, %s79
      %s96 = sphi 0, %s80
      %s104 = sphi 0, %s106
      %s107 = sphi 0, %s104
      %s108 = sphi 0, %s107
      %s124 = sphi 0, %s108
      %s132 = sphi 0, %s134
      %s135 = sphi 0, %s132
      %s136 = sphi 0, %s135
      %s152 = sphi 0, %s136
      %s158 = sphi 0, %s160
      %s161 = sphi 0, %s158
      %s162 = sphi 0, %s161
      %s178 = sphi 0, %s162
      %s182 = sphi 0, %s182
      %s184 = sphi 0, %s182
      %s185 = sphi 0, %s184
      %s199 = sphi 0, %s185
      %s205 = sphi 0, %s207
      %s208 = sphi 0, %s205
      %s209 = sphi 0, %s208
      %s225 = sphi 0, %s209
      %s231 = sphi 0, %s233
      %s234 = sphi 0, %s231
      %s235 = sphi 0, %s234
      %s251 = sphi 0, %s235
      %s257 = sphi 0, %s259
      %s260 = sphi 0, %s257
      %s261 = sphi 0, %s260
      %s277 = sphi 0, %s261
    $region4: #{tpu_custom_call.1} parent=1 // loop_header_branch
      %27 = sbr.rel (%p25) target = $region8
    $region5: #{tpu_custom_call.1} parent=1 // loop_body
      %s29 = ssub.s32 %s24, 1
      %s30 = ssub.s32 %s24, 2
      %s37 = sadd.s32 1, %s32
      %p38 = scmp.ge.s32.totalorder %s37, 1
      %s39 = scalar_select %p38, 0, %s37
      %s40 = sadd.s32 1, %s31
      %s41 = scalar_select %p38, %s40, %s31
      %p42 = scmp.ge.s32.totalorder %s41, 2
      %s43 = scalar_select %p42, 0, %s41
      %s44 = ssub.s32 %s31, %s43
      %s45 = ssub.s32 %s32, %s39
      %s46 = sor.u32 %s44, %s45
      %p47 = scmp.eq.s32.totalorder %s46, 0
      %s49 = sadd.s32 %s48, 1
      %s50 = scalar_select %p47, %s48, %s49
      %p53 = pneg %p47
      %p54 = scmp.eq.s32.totalorder %s24, 1
      %p55 = por %p53, %p54
      %p56 = scmp.ne.s32.totalorder %s48, %s51
      %p57 = scmp.eq.s32.totalorder %s24, 0
      %p58 = por %p56, %p57
      %p59 = scmp.ne.s32.totalorder %s48, %s51
      %p60 = scmp.eq.s32.totalorder %s29, 1
      %p61 = por %p59, %p60
      %p62 = scmp.ne.s32.totalorder %s51, %s52
      %p63 = scmp.eq.s32.totalorder %s29, 0
      %p64 = por %p62, %p63
      %p65 = scmp.ne.s32.totalorder %s51, %s52
      %p66 = scmp.eq.s32.totalorder %s30, 1
      %p67 = por %p65, %p66
      %p69 = scmp.ne.s32.totalorder %s52, %s68
      %p70 = scmp.eq.s32.totalorder %s30, 0
      %p71 = por %p69, %p70
      %s72 = ssub.s32 %s31, %s43
      %s73 = ssub.s32 %s32, %s39
      %s74 = sor.u32 %s72, %s73
      %p75 = scmp.eq.s32.totalorder %s74, 0
      %s77 = sadd.s32 %s76, 1
      %s78 = scalar_select %p75, %s76, %s77
      %p81 = pneg %p75
      %p82 = scmp.eq.s32.totalorder %s24, 1
      %p83 = por %p81, %p82
      %p84 = scmp.ne.s32.totalorder %s76, %s79
      %p85 = scmp.eq.s32.totalorder %s24, 0
      %p86 = por %p84, %p85
      %p87 = scmp.ne.s32.totalorder %s76, %s79
      %p88 = scmp.eq.s32.totalorder %s29, 1
      %p89 = por %p87, %p88
      %p90 = scmp.ne.s32.totalorder %s79, %s80
      %p91 = scmp.eq.s32.totalorder %s29, 0
      %p92 = por %p90, %p91
      %p93 = scmp.ne.s32.totalorder %s79, %s80
      %p94 = scmp.eq.s32.totalorder %s30, 1
      %p95 = por %p93, %p94
      %p97 = scmp.ne.s32.totalorder %s80, %s96
      %p98 = scmp.eq.s32.totalorder %s30, 0
      %p99 = por %p97, %p98
      %s100 = ssub.s32 %s31, %s43
      %s101 = ssub.s32 %s32, %s39
      %s102 = sor.u32 %s100, %s101
      %p103 = scmp.eq.s32.totalorder %s102, 0
      %s105 = sadd.s32 %s104, 1
      %s106 = scalar_select %p103, %s104, %s105
      %p109 = pneg %p103
      %p110 = scmp.eq.s32.totalorder %s24, 1
      %p111 = por %p109, %p110
      %p112 = scmp.ne.s32.totalorder %s104, %s107
      %p113 = scmp.eq.s32.totalorder %s24, 0
      %p114 = por %p112, %p113
      %p115 = scmp.ne.s32.totalorder %s104, %s107
      %p116 = scmp.eq.s32.totalorder %s29, 1
      %p117 = por %p115, %p116
      %p118 = scmp.ne.s32.totalorder %s107, %s108
      %p119 = scmp.eq.s32.totalorder %s29, 0
      %p120 = por %p118, %p119
      %p121 = scmp.ne.s32.totalorder %s107, %s108
      %p122 = scmp.eq.s32.totalorder %s30, 1
      %p123 = por %p121, %p122
      %p125 = scmp.ne.s32.totalorder %s108, %s124
      %p126 = scmp.eq.s32.totalorder %s30, 0
      %p127 = por %p125, %p126
      %s128 = ssub.s32 %s31, %s43
      %s129 = ssub.s32 %s32, %s39
      %s130 = sor.u32 %s128, %s129
      %p131 = scmp.eq.s32.totalorder %s130, 0
      %s133 = sadd.s32 %s132, 1
      %s134 = scalar_select %p131, %s132, %s133
      %p137 = pneg %p131
      %p138 = scmp.eq.s32.totalorder %s24, 1
      %p139 = por %p137, %p138
      %p140 = scmp.ne.s32.totalorder %s132, %s135
      %p141 = scmp.eq.s32.totalorder %s24, 0
      %p142 = por %p140, %p141
      %p143 = scmp.ne.s32.totalorder %s132, %s135
      %p144 = scmp.eq.s32.totalorder %s29, 1
      %p145 = por %p143, %p144
      %p146 = scmp.ne.s32.totalorder %s135, %s136
      %p147 = scmp.eq.s32.totalorder %s29, 0
      %p148 = por %p146, %p147
      %p149 = scmp.ne.s32.totalorder %s135, %s136
      %p150 = scmp.eq.s32.totalorder %s30, 1
      %p151 = por %p149, %p150
      %p153 = scmp.ne.s32.totalorder %s136, %s152
      %p154 = scmp.eq.s32.totalorder %s30, 0
      %p155 = por %p153, %p154
      %s156 = ssub.s32 %s32, %s39
      %p157 = scmp.eq.s32.totalorder %s156, 0
      %s159 = sadd.s32 %s158, 1
      %s160 = scalar_select %p157, %s158, %s159
      %p163 = pneg %p157
      %p164 = scmp.eq.s32.totalorder %s24, 1
      %p165 = por %p163, %p164
      %p166 = scmp.ne.s32.totalorder %s158, %s161
      %p167 = scmp.eq.s32.totalorder %s24, 0
      %p168 = por %p166, %p167
      %p169 = scmp.ne.s32.totalorder %s158, %s161
      %p170 = scmp.eq.s32.totalorder %s29, 1
      %p171 = por %p169, %p170
      %p172 = scmp.ne.s32.totalorder %s161, %s162
      %p173 = scmp.eq.s32.totalorder %s29, 0
      %p174 = por %p172, %p173
      %p175 = scmp.ne.s32.totalorder %s161, %s162
      %p176 = scmp.eq.s32.totalorder %s30, 1
      %p177 = por %p175, %p176
      %p179 = scmp.ne.s32.totalorder %s162, %s178
      %p180 = scmp.eq.s32.totalorder %s30, 0
      %p181 = por %p179, %p180
      %s183 = sadd.s32 %s182, 1
      %p186 = scmp.eq.s32.totalorder %s24, 1
      %p187 = scmp.ne.s32.totalorder %s182, %s184
      %p188 = scmp.eq.s32.totalorder %s24, 0
      %p189 = por %p187, %p188
      %p190 = scmp.ne.s32.totalorder %s182, %s184
      %p191 = scmp.eq.s32.totalorder %s29, 1
      %p192 = por %p190, %p191
      %p193 = scmp.ne.s32.totalorder %s184, %s185
      %p194 = scmp.eq.s32.totalorder %s29, 0
      %p195 = por %p193, %p194
      %p196 = scmp.ne.s32.totalorder %s184, %s185
      %p197 = scmp.eq.s32.totalorder %s30, 1
      %p198 = por %p196, %p197
      %p200 = scmp.ne.s32.totalorder %s185, %s199
      %p201 = scmp.eq.s32.totalorder %s30, 0
      %p202 = por %p200, %p201
      %s203 = ssub.s32 %s31, %s43
      %p204 = scmp.eq.s32.totalorder %s203, 0
      %s206 = sadd.s32 %s205, 1
      %s207 = scalar_select %p204, %s205, %s206
      %p210 = pneg %p204
      %p211 = scmp.eq.s32.totalorder %s24, 1
      %p212 = por %p210, %p211
      %p213 = scmp.ne.s32.totalorder %s205, %s208
      %p214 = scmp.eq.s32.totalorder %s24, 0
      %p215 = por %p213, %p214
      %p216 = scmp.ne.s32.totalorder %s205, %s208
      %p217 = scmp.eq.s32.totalorder %s29, 1
      %p218 = por %p216, %p217
      %p219 = scmp.ne.s32.totalorder %s208, %s209
      %p220 = scmp.eq.s32.totalorder %s29, 0
      %p221 = por %p219, %p220
      %p222 = scmp.ne.s32.totalorder %s208, %s209
      %p223 = scmp.eq.s32.totalorder %s30, 1
      %p224 = por %p222, %p223
      %p226 = scmp.ne.s32.totalorder %s209, %s225
      %p227 = scmp.eq.s32.totalorder %s30, 0
      %p228 = por %p226, %p227
      %s229 = ssub.s32 %s31, %s43
      %p230 = scmp.eq.s32.totalorder %s229, 0
      %s232 = sadd.s32 %s231, 1
      %s233 = scalar_select %p230, %s231, %s232
      %p236 = pneg %p230
      %p237 = scmp.eq.s32.totalorder %s24, 1
      %p238 = por %p236, %p237
      %p239 = scmp.ne.s32.totalorder %s231, %s234
      %p240 = scmp.eq.s32.totalorder %s24, 0
      %p241 = por %p239, %p240
      %p242 = scmp.ne.s32.totalorder %s231, %s234
      %p243 = scmp.eq.s32.totalorder %s29, 1
      %p244 = por %p242, %p243
      %p245 = scmp.ne.s32.totalorder %s234, %s235
      %p246 = scmp.eq.s32.totalorder %s29, 0
      %p247 = por %p245, %p246
      %p248 = scmp.ne.s32.totalorder %s234, %s235
      %p249 = scmp.eq.s32.totalorder %s30, 1
      %p250 = por %p248, %p249
      %p252 = scmp.ne.s32.totalorder %s235, %s251
      %p253 = scmp.eq.s32.totalorder %s30, 0
      %p254 = por %p252, %p253
      %s255 = ssub.s32 %s31, %s43
      %p256 = scmp.eq.s32.totalorder %s255, 0
      %s258 = sadd.s32 %s257, 1
      %s259 = scalar_select %p256, %s257, %s258
      %p262 = pneg %p256
      %p263 = scmp.eq.s32.totalorder %s24, 1
      %p264 = por %p262, %p263
      %p265 = scmp.ne.s32.totalorder %s257, %s260
      %p266 = scmp.eq.s32.totalorder %s24, 0
      %p267 = por %p265, %p266
      %p268 = scmp.ne.s32.totalorder %s257, %s260
      %p269 = scmp.eq.s32.totalorder %s29, 1
      %p270 = por %p268, %p269
      %p271 = scmp.ne.s32.totalorder %s260, %s261
      %p272 = scmp.eq.s32.totalorder %s29, 0
      %p273 = por %p271, %p272
      %p274 = scmp.ne.s32.totalorder %s260, %s261
      %p275 = scmp.eq.s32.totalorder %s30, 1
      %p276 = por %p274, %p275
      %p278 = scmp.ne.s32.totalorder %s261, %s277
      %p279 = scmp.eq.s32.totalorder %s30, 0
      %p280 = por %p278, %p279
      %p281 = scmp.le.s32.totalorder 1, %s24
      %p282 = scmp.lt.s32.totalorder %s24, 3
      %p283 = pnand %p281, %p282
      %p284 = pneg %p283
      // Predicated region
      $region9: #{tpu_custom_call.1} parent=5 // pred_check
        _
      $region10: #{tpu_custom_call.1} parent=5 // pred_check_branch
        %286 = sbr.rel (%p283) target = $region12
      $region11: #{tpu_custom_call.1} parent=5 // pred_region
        %s287 = ssub.s32 %s24, 1
        // Predicated region
        $region13: #{tpu_custom_call.1} parent=11 // pred_check
          %p288 = pneg %p174
        $region14: #{tpu_custom_call.1} parent=11 // pred_check_branch
          %290 = sbr.rel (%p288) target = $region16
        $region15: #{tpu_custom_call.1} parent=11 // pred_region
          %s291 = smul.u32 8, %s34
          %293 = vsyncadd [#allocation11], 0
          %s294 = smul.addr %s291, 4
          %s295 = scalar_lea.hbm %s4, %s294
          %s297 = sshll.u32 %s295, 4
          %s298 = int_to_ptr.hbm [resolvable:$true] %s297
          %s299 = sshll.u32 [#allocation12], 4
          %s300 = int_to_ptr.vmem [resolvable:$true] %s299
          %302 = dma.hbm_to_vmem [thread:$0]  %s298, 512, %s300, [#allocation11]
        $region16: #{tpu_custom_call.1} parent=11 // pred_fallthru
          _
        // Predicated region
        $region17: #{tpu_custom_call.1} parent=11 // pred_check
          %p303 = pneg %p195
        $region18: #{tpu_custom_call.1} parent=11 // pred_check_branch
          %305 = sbr.rel (%p303) target = $region20
        $region19: #{tpu_custom_call.1} parent=11 // pred_region
          _
        $region20: #{tpu_custom_call.1} parent=11 // pred_fallthru
          _
      $region12: #{tpu_custom_call.1} parent=5 // pred_fallthru
        _
      %p306 = scmp.lt.s32.totalorder %s24, 2
      // Predicated region
      $region21: #{tpu_custom_call.1} parent=5 // pred_check
        %p307 = pneg %p306
      $region22: #{tpu_custom_call.1} parent=5 // pred_check_branch
        %309 = sbr.rel (%p307) target = $region24
      $region23: #{tpu_custom_call.1} parent=5 // pred_region
        // Predicated region
        $region25: #{tpu_custom_call.1} parent=23 // pred_check
          %p310 = pneg %p58
        $region26: #{tpu_custom_call.1} parent=23 // pred_check_branch
          %312 = sbr.rel (%p310) target = $region28
        $region27: #{tpu_custom_call.1} parent=23 // pred_region
          %s313 = sand.u32 %s48, 1
          %s314 = scalar_lea.sflag [#allocation6], %s313
          %s315 = sand.u32 %s48, 1
          %s316 = smul.addr %s315, 64
          %s317 = scalar_lea.vmem [#allocation5], %s316
          %s318 = smul.u32 8, %s32
          %320 = vsyncadd %s314, 0
          %s321 = smul.addr %s31, 8
          %s322 = sadd.s32 %s318, %s321
          %s323 = smul.addr %s322, 8
          %s324 = scalar_lea.hbm %s0, %s323
          %s326 = sshll.u32 %s324, 4
          %s327 = int_to_ptr.hbm [resolvable:$true] %s326
          %s328 = sshll.u32 %s317, 4
          %s329 = int_to_ptr.vmem [resolvable:$true] %s328
          %331 = dma.hbm_to_vmem [thread:$0]  %s327, 1024, %s329, %s314
        $region28: #{tpu_custom_call.1} parent=23 // pred_fallthru
          _
        // Predicated region
        $region29: #{tpu_custom_call.1} parent=23 // pred_check
          %p332 = pneg %p86
        $region30: #{tpu_custom_call.1} parent=23 // pred_check_branch
          %334 = sbr.rel (%p332) target = $region32
        $region31: #{tpu_custom_call.1} parent=23 // pred_region
          %s335 = sand.u32 %s24, 1
          %s336 = scalar_lea.sflag [#allocation8], %s335
          %s337 = sand.u32 %s76, 1
          %s338 = smul.addr %s337, 8
          %s339 = scalar_lea.vmem [#allocation7], %s338
          %s340 = smul.u32 8, %s32
          %342 = vsyncadd %s336, 0
          %s343 = smul.addr %s31, 8
          %s344 = sadd.s32 %s340, %s343
          %s345 = scalar_lea.hbm %s1, %s344
          %s347 = sshll.u32 %s345, 4
          %s348 = int_to_ptr.hbm [resolvable:$true] %s347
          %s349 = sshll.u32 %s339, 4
          %s350 = int_to_ptr.vmem [resolvable:$true] %s349
          %352 = dma.hbm_to_vmem [thread:$0]  %s348, 128, %s350, %s336
        $region32: #{tpu_custom_call.1} parent=23 // pred_fallthru
          _
        // Predicated region
        $region33: #{tpu_custom_call.1} parent=23 // pred_check
          %p353 = pneg %p114
        $region34: #{tpu_custom_call.1} parent=23 // pred_check_branch
          %355 = sbr.rel (%p353) target = $region36
        $region35: #{tpu_custom_call.1} parent=23 // pred_region
          %s356 = sand.u32 %s24, 1
          %s357 = scalar_lea.sflag [#allocation8], %s356
          %s358 = sand.u32 %s104, 1
          %s359 = smul.addr %s358, 32
          %s360 = scalar_lea.vmem [#allocation9], %s359
          %s361 = smul.u32 8, %s32
          %363 = vsyncadd %s357, 0
          %s364 = smul.addr %s31, 8
          %s365 = sadd.s32 %s361, %s364
          %s366 = smul.addr %s365, 4
          %s367 = scalar_lea.hbm %s2, %s366
          %s369 = sshll.u32 %s367, 4
          %s370 = int_to_ptr.hbm [resolvable:$true] %s369
          %s371 = sshll.u32 %s360, 4
          %s372 = int_to_ptr.vmem [resolvable:$true] %s371
          %374 = dma.hbm_to_vmem [thread:$0]  %s370, 512, %s372, %s357
        $region36: #{tpu_custom_call.1} parent=23 // pred_fallthru
          _
        // Predicated region
        $region37: #{tpu_custom_call.1} parent=23 // pred_check
          %p375 = pneg %p142
        $region38: #{tpu_custom_call.1} parent=23 // pred_check_branch
          %377 = sbr.rel (%p375) target = $region40
        $region39: #{tpu_custom_call.1} parent=23 // pred_region
          %s378 = sand.u32 %s24, 1
          %s379 = scalar_lea.sflag [#allocation11], %s378
          %s380 = sand.u32 %s132, 1
          %s381 = smul.addr %s380, 32
          %s382 = scalar_lea.vmem [#allocation10], %s381
          %s383 = smul.u32 8, %s32
          %385 = vsyncadd %s379, 0
          %s386 = smul.addr %s31, 8
          %s387 = sadd.s32 %s383, %s386
          %s388 = smul.addr %s387, 4
          %s389 = scalar_lea.hbm %s3, %s388
          %s391 = sshll.u32 %s389, 4
          %s392 = int_to_ptr.hbm [resolvable:$true] %s391
          %s393 = sshll.u32 %s382, 4
          %s394 = int_to_ptr.vmem [resolvable:$true] %s393
          %396 = dma.hbm_to_vmem [thread:$0]  %s392, 512, %s394, %s379
        $region40: #{tpu_custom_call.1} parent=23 // pred_fallthru
          _
      $region24: #{tpu_custom_call.1} parent=5 // pred_fallthru
        _
      %p397 = scmp.le.s32.totalorder 1, %s24
      %p398 = scmp.lt.s32.totalorder %s24, 3
      %p399 = pnand %p397, %p398
      %p400 = pneg %p399
      // Predicated region
      $region41: #{tpu_custom_call.1} parent=5 // pred_check
        _
      $region42: #{tpu_custom_call.1} parent=5 // pred_check_branch
        %402 = sbr.rel (%p399) target = $region44
      $region43: #{tpu_custom_call.1} parent=5 // pred_region
        %s403 = ssub.s32 %s24, 1
        %s404 = sand.u32 %s51, 1
        %s405 = scalar_lea.sflag [#allocation6], %s404
        %s406 = sand.u32 %s51, 1
        %s407 = smul.addr %s406, 64
        %s408 = scalar_lea.vmem [#allocation5], %s407
        // Predicated region
        $region45: #{tpu_custom_call.1} parent=43 // pred_check
          %p409 = pneg %p64
        $region46: #{tpu_custom_call.1} parent=43 // pred_check_branch
          %411 = sbr.rel (%p409) target = $region48
        $region47: #{tpu_custom_call.1} parent=43 // pred_region
          %413 = dma.done %s405, 1024
        $region48: #{tpu_custom_call.1} parent=43 // pred_fallthru
          _
        %s414 = sand.u32 %s29, 1
        %s415 = scalar_lea.sflag [#allocation8], %s414
        %s416 = sand.u32 %s79, 1
        %s417 = smul.addr %s416, 8
        %s418 = scalar_lea.vmem [#allocation7], %s417
        // Predicated region
        $region49: #{tpu_custom_call.1} parent=43 // pred_check
          %p419 = pneg %p92
        $region50: #{tpu_custom_call.1} parent=43 // pred_check_branch
          %421 = sbr.rel (%p419) target = $region52
        $region51: #{tpu_custom_call.1} parent=43 // pred_region
          %423 = dma.done %s415, 128
        $region52: #{tpu_custom_call.1} parent=43 // pred_fallthru
          _
        %s424 = sand.u32 %s29, 1
        %s425 = scalar_lea.sflag [#allocation8], %s424
        %s426 = sand.u32 %s107, 1
        %s427 = smul.addr %s426, 32
        %s428 = scalar_lea.vmem [#allocation9], %s427
        // Predicated region
        $region53: #{tpu_custom_call.1} parent=43 // pred_check
          %p429 = pneg %p120
        $region54: #{tpu_custom_call.1} parent=43 // pred_check_branch
          %431 = sbr.rel (%p429) target = $region56
        $region55: #{tpu_custom_call.1} parent=43 // pred_region
          %433 = dma.done %s425, 512
        $region56: #{tpu_custom_call.1} parent=43 // pred_fallthru
          _
        %s434 = sand.u32 %s29, 1
        %s435 = scalar_lea.sflag [#allocation11], %s434
        %s436 = sand.u32 %s135, 1
        %s437 = smul.addr %s436, 32
        %s438 = scalar_lea.vmem [#allocation10], %s437
        // Predicated region
        $region57: #{tpu_custom_call.1} parent=43 // pred_check
          %p439 = pneg %p148
        $region58: #{tpu_custom_call.1} parent=43 // pred_check_branch
          %441 = sbr.rel (%p439) target = $region60
        $region59: #{tpu_custom_call.1} parent=43 // pred_region
          %443 = dma.done %s435, 512
        $region60: #{tpu_custom_call.1} parent=43 // pred_fallthru
          _
        // Predicated region
        $region61: #{tpu_custom_call.1} parent=43 // pred_check
          %p444 = pneg %p174
        $region62: #{tpu_custom_call.1} parent=43 // pred_check_branch
          %446 = sbr.rel (%p444) target = $region64
        $region63: #{tpu_custom_call.1} parent=43 // pred_region
          %448 = dma.done [#allocation11], 512
        $region64: #{tpu_custom_call.1} parent=43 // pred_fallthru
          _
        %s449 = sand.u32 %s51, 1
        %s450 = scalar_lea.sflag [#allocation6], %s449
        %s451 = sand.u32 %s51, 1
        %s452 = smul.addr %s451, 64
        %s453 = scalar_lea.vmem [#allocation5], %s452
        %p454 = pneg %p64
        %p455 = pneg %p61
        %s456 = sand.u32 %s29, 1
        %s457 = scalar_lea.sflag [#allocation8], %s456
        %s458 = sand.u32 %s79, 1
        %s459 = smul.addr %s458, 8
        %s460 = scalar_lea.vmem [#allocation7], %s459
        %p461 = pneg %p92
        %p462 = pneg %p89
        %s463 = sand.u32 %s29, 1
        %s464 = scalar_lea.sflag [#allocation8], %s463
        %s465 = sand.u32 %s107, 1
        %s466 = smul.addr %s465, 32
        %s467 = scalar_lea.vmem [#allocation9], %s466
        %p468 = pneg %p120
        %p469 = pneg %p117
        %s470 = sand.u32 %s29, 1
        %s471 = scalar_lea.sflag [#allocation11], %s470
        %s472 = sand.u32 %s135, 1
        %s473 = smul.addr %s472, 32
        %s474 = scalar_lea.vmem [#allocation10], %s473
        %p475 = pneg %p148
        %p476 = pneg %p145
        %p477 = pneg %p174
        %p478 = pneg %p171
        %p479 = pneg %p195
        %p480 = pneg %p192
        %p481 = pneg %p221
        %p482 = pneg %p218
        %p483 = scmp.lt.s32.totalorder %s33, 1
        %s484 = scalar_select %p483, %s33, 1
        %s485 = scalar_lea.vmem %s6, %s484
        %p486 = pneg %p247
        %p487 = pneg %p244
        %p488 = scmp.lt.s32.totalorder %s33, 1
        %s489 = scalar_select %p488, %s33, 1
        %s490 = scalar_lea.vmem %s7, %s489
        %p491 = pneg %p273
        %p492 = pneg %p270
        %p493 = scmp.lt.s32.totalorder %s33, 1
        %s494 = scalar_select %p493, %s33, 1
        %s495 = scalar_lea.vmem %s8, %s494
        %s496 = smul.u32 8, %s34
        %s497 = smul.u32 8, %s34
        %s498 = smul.u32 8, %s34
        %s499 = smul.u32 8, %s34
        %s500 = smul.u32 8, %s34
        %p501 = scmp.lt.s32.totalorder %s33, 1
        %s502 = scalar_select %p501, %s33, 1
        %s503 = scalar_lea.vmem %s6, %s502
        %p504 = scmp.lt.s32.totalorder %s33, 1
        %s505 = scalar_select %p504, %s33, 1
        %s506 = scalar_lea.vmem %s7, %s505
        %p507 = scmp.lt.s32.totalorder %s33, 1
        %s508 = scalar_select %p507, %s33, 1
        %s509 = scalar_lea.vmem %s8, %s508
        %p510 = scmp.eq.s32.totalorder %s34, 0
        // Predicated region
        $region65: #{tpu_custom_call.1} parent=43 // pred_check
          %p511 = pneg %p510
        $region66: #{tpu_custom_call.1} parent=43 // pred_check_branch
          %513 = sbr.rel (%p511) target = $region68
        $region67: #{tpu_custom_call.1} parent=43 // pred_region
          %514 = vst [vmem:[#allocation2] sm:$0xff] 0.0
          %515 = vst [vmem:[#allocation3] sm:$0xff] 0.0
          %516 = vst [vmem:[#allocation3 + $0x8] sm:$0xff] 0.0
          %517 = vst [vmem:[#allocation3 + $0x10] sm:$0xff] 0.0
          %518 = vst [vmem:[#allocation3 + $0x18] sm:$0xff] 0.0
          %519 = vst [vmem:[#allocation4] sm:$0xff] 0.0
        $region68: #{tpu_custom_call.1} parent=43 // pred_fallthru
          _
        %v520 = vld [vmem:[%s408] sm:$0xff]
        %v521 = vld [vmem:[%s408 + $0x8] sm:$0xff]
        %v522 = vld [vmem:[%s408 + $0x10] sm:$0xff]
        %v523 = vld [vmem:[%s408 + $0x18] sm:$0xff]
        %v524 = vld [vmem:[%s408 + $0x20] sm:$0xff]
        %v525 = vld [vmem:[%s408 + $0x28] sm:$0xff]
        %v526 = vld [vmem:[%s408 + $0x30] sm:$0xff]
        %v527 = vld [vmem:[%s408 + $0x38] sm:$0xff]
        %v528 = vld [vmem:[%s418] sm:$0xff]
        %v529 = vrot.slane %v520, 4
        %v530 = vmax.f32 %v520, %v529
        %v531 = vrot.slane %v530, 2
        %v532 = vmax.f32 %v530, %v531
        %v533 = vrot.slane %v532, 1
        %v534 = vmax.f32 %v532, %v533
        %v535 = vrot.slane %v521, 4
        %v536 = vmax.f32 %v521, %v535
        %v537 = vrot.slane %v536, 2
        %v538 = vmax.f32 %v536, %v537
        %v539 = vrot.slane %v538, 1
        %v540 = vmax.f32 %v538, %v539
        %v541 = vrot.slane %v522, 4
        %v542 = vmax.f32 %v522, %v541
        %v543 = vrot.slane %v542, 2
        %v544 = vmax.f32 %v542, %v543
        %v545 = vrot.slane %v544, 1
        %v546 = vmax.f32 %v544, %v545
        %v547 = vrot.slane %v523, 4
        %v548 = vmax.f32 %v523, %v547
        %v549 = vrot.slane %v548, 2
        %v550 = vmax.f32 %v548, %v549
        %v551 = vrot.slane %v550, 1
        %v552 = vmax.f32 %v550, %v551
        %v553 = vrot.slane %v524, 4
        %v554 = vmax.f32 %v524, %v553
        %v555 = vrot.slane %v554, 2
        %v556 = vmax.f32 %v554, %v555
        %v557 = vrot.slane %v556, 1
        %v558 = vmax.f32 %v556, %v557
        %v559 = vrot.slane %v525, 4
        %v560 = vmax.f32 %v525, %v559
        %v561 = vrot.slane %v560, 2
        %v562 = vmax.f32 %v560, %v561
        %v563 = vrot.slane %v562, 1
        %v564 = vmax.f32 %v562, %v563
        %v565 = vrot.slane %v526, 4
        %v566 = vmax.f32 %v526, %v565
        %v567 = vrot.slane %v566, 2
        %v568 = vmax.f32 %v566, %v567
        %v569 = vrot.slane %v568, 1
        %v570 = vmax.f32 %v568, %v569
        %v571 = vrot.slane %v527, 4
        %v572 = vmax.f32 %v527, %v571
        %v573 = vrot.slane %v572, 2
        %v574 = vmax.f32 %v572, %v573
        %v575 = vrot.slane %v574, 1
        %v576 = vmax.f32 %v574, %v575
        %v577 = vsub.f32 %v520, %v534
        %v578 = vsub.f32 %v521, %v540
        %v579 = vsub.f32 %v522, %v546
        %v580 = vsub.f32 %v523, %v552
        %v581 = vsub.f32 %v524, %v558
        %v582 = vsub.f32 %v525, %v564
        %v583 = vsub.f32 %v526, %v570
        %v584 = vsub.f32 %v527, %v576
        %v585 = vmul.f32 %v577, 1.442695
        %v586 = vpow.pop %v585
        %v587 = vmul.f32 %v578, 1.442695
        %v588 = vpow.pop %v587
        %v589 = vmul.f32 %v579, 1.442695
        %v590 = vpow.pop %v589
        %v591 = vmul.f32 %v580, 1.442695
        %v592 = vpow.pop %v591
        %v593 = vmul.f32 %v581, 1.442695
        %v594 = vpow.pop %v593
        %v595 = vmul.f32 %v582, 1.442695
        %v596 = vpow.pop %v595
        %v597 = vmul.f32 %v583, 1.442695
        %v598 = vpow.pop %v597
        %v599 = vmul.f32 %v584, 1.442695
        %v600 = vpow.pop %v599
        %v601 = vrot.slane %v586, 4
        %v602 = vadd.f32 %v586, %v601
        %v603 = vrot.slane %v602, 2
        %v604 = vadd.f32 %v602, %v603
        %v605 = vrot.slane %v604, 1
        %v606 = vadd.f32 %v604, %v605
        %v607 = vrot.slane %v588, 4
        %v608 = vadd.f32 %v588, %v607
        %v609 = vrot.slane %v608, 2
        %v610 = vadd.f32 %v608, %v609
        %v611 = vrot.slane %v610, 1
        %v612 = vadd.f32 %v610, %v611
        %v613 = vrot.slane %v590, 4
        %v614 = vadd.f32 %v590, %v613
        %v615 = vrot.slane %v614, 2
        %v616 = vadd.f32 %v614, %v615
        %v617 = vrot.slane %v616, 1
        %v618 = vadd.f32 %v616, %v617
        %v619 = vrot.slane %v592, 4
        %v620 = vadd.f32 %v592, %v619
        %v621 = vrot.slane %v620, 2
        %v622 = vadd.f32 %v620, %v621
        %v623 = vrot.slane %v622, 1
        %v624 = vadd.f32 %v622, %v623
        %v625 = vrot.slane %v594, 4
        %v626 = vadd.f32 %v594, %v625
        %v627 = vrot.slane %v626, 2
        %v628 = vadd.f32 %v626, %v627
        %v629 = vrot.slane %v628, 1
        %v630 = vadd.f32 %v628, %v629
        %v631 = vrot.slane %v596, 4
        %v632 = vadd.f32 %v596, %v631
        %v633 = vrot.slane %v632, 2
        %v634 = vadd.f32 %v632, %v633
        %v635 = vrot.slane %v634, 1
        %v636 = vadd.f32 %v634, %v635
        %v637 = vrot.slane %v598, 4
        %v638 = vadd.f32 %v598, %v637
        %v639 = vrot.slane %v638, 2
        %v640 = vadd.f32 %v638, %v639
        %v641 = vrot.slane %v640, 1
        %v642 = vadd.f32 %v640, %v641
        %v643 = vrot.slane %v600, 4
        %v644 = vadd.f32 %v600, %v643
        %v645 = vrot.slane %v644, 2
        %v646 = vadd.f32 %v644, %v645
        %v647 = vrot.slane %v646, 1
        %v648 = vadd.f32 %v646, %v647
        %v649 = vlog2.pop %v606
        %v650 = vmul.f32 %v649, 0.6931472
        %v651 = vlog2.pop %v612
        %v652 = vmul.f32 %v651, 0.6931472
        %v653 = vlog2.pop %v618
        %v654 = vmul.f32 %v653, 0.6931472
        %v655 = vlog2.pop %v624
        %v656 = vmul.f32 %v655, 0.6931472
        %v657 = vlog2.pop %v630
        %v658 = vmul.f32 %v657, 0.6931472
        %v659 = vlog2.pop %v636
        %v660 = vmul.f32 %v659, 0.6931472
        %v661 = vlog2.pop %v642
        %v662 = vmul.f32 %v661, 0.6931472
        %v663 = vlog2.pop %v648
        %v664 = vmul.f32 %v663, 0.6931472
        %v665 = vlaneseq
        %v666 = vshrl.u32 %v665, 7
        %v667 = vperm.slane %v528, 0
        %v668 = vperm.slane %v528, 1
        %v669 = vperm.slane %v528, 2
        %v670 = vperm.slane %v528, 3
        %v671 = vperm.slane %v528, 4
        %v672 = vperm.slane %v528, 5
        %v673 = vperm.slane %v528, 6
        %v674 = vperm.slane %v528, 7
        %vm675 = vcmp.eq.s32.totalorder %v666, %v667
        %vm676 = vcmp.eq.s32.totalorder %v666, %v668
        %vm677 = vcmp.eq.s32.totalorder %v666, %v669
        %vm678 = vcmp.eq.s32.totalorder %v666, %v670
        %vm679 = vcmp.eq.s32.totalorder %v666, %v671
        %vm680 = vcmp.eq.s32.totalorder %v666, %v672
        %vm681 = vcmp.eq.s32.totalorder %v666, %v673
        %vm682 = vcmp.eq.s32.totalorder %v666, %v674
        %v683 = vsel %vm675, %v577, 0.0
        %v684 = vsel %vm676, %v578, 0.0
        %v685 = vsel %vm677, %v579, 0.0
        %v686 = vsel %vm678, %v580, 0.0
        %v687 = vsel %vm679, %v581, 0.0
        %v688 = vsel %vm680, %v582, 0.0
        %v689 = vsel %vm681, %v583, 0.0
        %v690 = vsel %vm682, %v584, 0.0
        %v691 = vrot.slane %v683, 4
        %v692 = vadd.f32 %v683, %v691
        %v693 = vrot.slane %v692, 2
        %v694 = vadd.f32 %v692, %v693
        %v695 = vrot.slane %v694, 1
        %v696 = vadd.f32 %v694, %v695
        %v697 = vrot.slane %v684, 4
        %v698 = vadd.f32 %v684, %v697
        %v699 = vrot.slane %v698, 2
        %v700 = vadd.f32 %v698, %v699
        %v701 = vrot.slane %v700, 1
        %v702 = vadd.f32 %v700, %v701
        %v703 = vrot.slane %v685, 4
        %v704 = vadd.f32 %v685, %v703
        %v705 = vrot.slane %v704, 2
        %v706 = vadd.f32 %v704, %v705
        %v707 = vrot.slane %v706, 1
        %v708 = vadd.f32 %v706, %v707
        %v709 = vrot.slane %v686, 4
        %v710 = vadd.f32 %v686, %v709
        %v711 = vrot.slane %v710, 2
        %v712 = vadd.f32 %v710, %v711
        %v713 = vrot.slane %v712, 1
        %v714 = vadd.f32 %v712, %v713
        %v715 = vrot.slane %v687, 4
        %v716 = vadd.f32 %v687, %v715
        %v717 = vrot.slane %v716, 2
        %v718 = vadd.f32 %v716, %v717
        %v719 = vrot.slane %v718, 1
        %v720 = vadd.f32 %v718, %v719
        %v721 = vrot.slane %v688, 4
        %v722 = vadd.f32 %v688, %v721
        %v723 = vrot.slane %v722, 2
        %v724 = vadd.f32 %v722, %v723
        %v725 = vrot.slane %v724, 1
        %v726 = vadd.f32 %v724, %v725
        %v727 = vrot.slane %v689, 4
        %v728 = vadd.f32 %v689, %v727
        %v729 = vrot.slane %v728, 2
        %v730 = vadd.f32 %v728, %v729
        %v731 = vrot.slane %v730, 1
        %v732 = vadd.f32 %v730, %v731
        %v733 = vrot.slane %v690, 4
        %v734 = vadd.f32 %v690, %v733
        %v735 = vrot.slane %v734, 2
        %v736 = vadd.f32 %v734, %v735
        %v737 = vrot.slane %v736, 1
        %v738 = vadd.f32 %v736, %v737
        %v739 = vsub.f32 %v696, %v650
        %v740 = vsub.f32 %v702, %v652
        %v741 = vsub.f32 %v708, %v654
        %v742 = vsub.f32 %v714, %v656
        %v743 = vsub.f32 %v720, %v658
        %v744 = vsub.f32 %v726, %v660
        %v745 = vsub.f32 %v732, %v662
        %v746 = vsub.f32 %v738, %v664
        %v747 = vmul.f32 %v739, 1.442695
        %v748 = vpow.pop %v747
        %v749 = vmul.f32 %v740, 1.442695
        %v750 = vpow.pop %v749
        %v751 = vmul.f32 %v741, 1.442695
        %v752 = vpow.pop %v751
        %v753 = vmul.f32 %v742, 1.442695
        %v754 = vpow.pop %v753
        %v755 = vmul.f32 %v743, 1.442695
        %v756 = vpow.pop %v755
        %v757 = vmul.f32 %v744, 1.442695
        %v758 = vpow.pop %v757
        %v759 = vmul.f32 %v745, 1.442695
        %v760 = vpow.pop %v759
        %v761 = vmul.f32 %v746, 1.442695
        %v762 = vpow.pop %v761
        %v763 = vld [vmem:[%s5] sm:$0xff]
        %765 = vset.pattern.permute.xlu0 0
        %766 = vperm.xlu0 %765, %v763
        %v767 = vpop.permute.xlu0 %766
        %v769 = vsel %vm675, %v767, 0.0
        %v770 = vsel %vm676, %v767, 0.0
        %v771 = vsel %vm677, %v767, 0.0
        %v772 = vsel %vm678, %v767, 0.0
        %v773 = vsel %vm679, %v767, 0.0
        %v774 = vsel %vm680, %v767, 0.0
        %v775 = vsel %vm681, %v767, 0.0
        %v776 = vsel %vm682, %v767, 0.0
        %v777 = vrot.slane %v769, 4
        %v778 = vadd.f32 %v769, %v777
        %v779 = vrot.slane %v778, 2
        %v780 = vadd.f32 %v778, %v779
        %v781 = vrot.slane %v780, 1
        %v782 = vadd.f32 %v780, %v781
        %v783 = vrot.slane %v770, 4
        %v784 = vadd.f32 %v770, %v783
        %v785 = vrot.slane %v784, 2
        %v786 = vadd.f32 %v784, %v785
        %v787 = vrot.slane %v786, 1
        %v788 = vadd.f32 %v786, %v787
        %v789 = vrot.slane %v771, 4
        %v790 = vadd.f32 %v771, %v789
        %v791 = vrot.slane %v790, 2
        %v792 = vadd.f32 %v790, %v791
        %v793 = vrot.slane %v792, 1
        %v794 = vadd.f32 %v792, %v793
        %v795 = vrot.slane %v772, 4
        %v796 = vadd.f32 %v772, %v795
        %v797 = vrot.slane %v796, 2
        %v798 = vadd.f32 %v796, %v797
        %v799 = vrot.slane %v798, 1
        %v800 = vadd.f32 %v798, %v799
        %v801 = vrot.slane %v773, 4
        %v802 = vadd.f32 %v773, %v801
        %v803 = vrot.slane %v802, 2
        %v804 = vadd.f32 %v802, %v803
        %v805 = vrot.slane %v804, 1
        %v806 = vadd.f32 %v804, %v805
        %v807 = vrot.slane %v774, 4
        %v808 = vadd.f32 %v774, %v807
        %v809 = vrot.slane %v808, 2
        %v810 = vadd.f32 %v808, %v809
        %v811 = vrot.slane %v810, 1
        %v812 = vadd.f32 %v810, %v811
        %v813 = vrot.slane %v775, 4
        %v814 = vadd.f32 %v775, %v813
        %v815 = vrot.slane %v814, 2
        %v816 = vadd.f32 %v814, %v815
        %v817 = vrot.slane %v816, 1
        %v818 = vadd.f32 %v816, %v817
        %v819 = vrot.slane %v776, 4
        %v820 = vadd.f32 %v776, %v819
        %v821 = vrot.slane %v820, 2
        %v822 = vadd.f32 %v820, %v821
        %v823 = vrot.slane %v822, 1
        %v824 = vadd.f32 %v822, %v823
        %v825 = vsub.f32 1.0, %v748
        %v826 = vsub.f32 1.0, %v750
        %v827 = vsub.f32 1.0, %v752
        %v828 = vsub.f32 1.0, %v754
        %v829 = vsub.f32 1.0, %v756
        %v830 = vsub.f32 1.0, %v758
        %v831 = vsub.f32 1.0, %v760
        %v832 = vsub.f32 1.0, %v762
        %v833 = vmax.f32 %v825, 0.0
        %v834 = vmax.f32 %v826, 0.0
        %v835 = vmax.f32 %v827, 0.0
        %v836 = vmax.f32 %v828, 0.0
        %v837 = vmax.f32 %v829, 0.0
        %v838 = vmax.f32 %v830, 0.0
        %v839 = vmax.f32 %v831, 0.0
        %v840 = vmax.f32 %v832, 0.0
        %v841 = vmul.f32 %v833, %v833
        %v842 = vmul.f32 %v834, %v834
        %v843 = vmul.f32 %v835, %v835
        %v844 = vmul.f32 %v836, %v836
        %v845 = vmul.f32 %v837, %v837
        %v846 = vmul.f32 %v838, %v838
        %v847 = vmul.f32 %v839, %v839
        %v848 = vmul.f32 %v840, %v840
        %v849 = vld [vmem:[#allocation2] sm:$0xff]
        %v850 = vmul.f32 %v841, %v739
        %v851 = vmul.f32 %v842, %v740
        %v852 = vmul.f32 %v843, %v741
        %v853 = vmul.f32 %v844, %v742
        %v854 = vmul.f32 %v845, %v743
        %v855 = vmul.f32 %v846, %v744
        %v856 = vmul.f32 %v847, %v745
        %v857 = vmul.f32 %v848, %v746
        %v858 = vmul.f32 %v850, %v782
        %v859 = vmul.f32 %v851, %v788
        %v860 = vmul.f32 %v852, %v794
        %v861 = vmul.f32 %v853, %v800
        %v862 = vmul.f32 %v854, %v806
        %v863 = vmul.f32 %v855, %v812
        %v864 = vmul.f32 %v856, %v818
        %v865 = vmul.f32 %v857, %v824
        %v866 = vsub.f32 0.0, %v858
        %v867 = vsub.f32 0.0, %v859
        %v868 = vsub.f32 0.0, %v860
        %v869 = vsub.f32 0.0, %v861
        %v870 = vsub.f32 0.0, %v862
        %v871 = vsub.f32 0.0, %v863
        %v872 = vsub.f32 0.0, %v864
        %v873 = vsub.f32 0.0, %v865
        %v882 = vrot.slane %v867, 7
        %v883 = vrot.slane %v868, 6
        %v884 = vrot.slane %v869, 5
        %v885 = vrot.slane %v870, 4
        %v886 = vrot.slane %v871, 3
        %v887 = vrot.slane %v872, 2
        %v888 = vrot.slane %v873, 1
        %vm889 = vcmask 1040384
        %v890 = vsel %vm889, %v866, %v882
        %vm891 = vcmask 1042434
        %v892 = vsel %vm891, %v883, %v884
        %vm893 = vcmask 1041408
        %v894 = vsel %vm893, %v890, %v892
        %vm895 = vcmask 1044484
        %v896 = vsel %vm895, %v885, %v886
        %vm897 = vcmask 1046534
        %v898 = vsel %vm897, %v887, %v888
        %vm899 = vcmask 1045508
        %v900 = vsel %vm899, %v896, %v898
        %vm901 = vcmask 1043456
        %v902 = vsel %vm901, %v894, %v900
        %v904 = vadd.f32 %v849, %v902
        %905 = vst [vmem:[#allocation2] sm:$0xff] %v904
        %v906 = vld [vmem:[#allocation12] sm:$0xff]
        %v907 = vld [vmem:[#allocation12 + $0x8] sm:$0xff]
        %v908 = vld [vmem:[#allocation12 + $0x10] sm:$0xff]
        %v909 = vld [vmem:[#allocation12 + $0x18] sm:$0xff]
        %v910 = vld [vmem:[%s438] sm:$0xff]
        %v911 = vld [vmem:[%s438 + $0x8] sm:$0xff]
        %v912 = vld [vmem:[%s438 + $0x10] sm:$0xff]
        %v913 = vld [vmem:[%s438 + $0x18] sm:$0xff]
        %v914 = vld [vmem:[%s428] sm:$0xff]
        %v915 = vld [vmem:[%s428 + $0x8] sm:$0xff]
        %v916 = vld [vmem:[%s428 + $0x10] sm:$0xff]
        %v917 = vld [vmem:[%s428 + $0x18] sm:$0xff]
        %v918 = vsub.f32 %v910, %v906
        %v919 = vsub.f32 %v911, %v907
        %v920 = vsub.f32 %v912, %v908
        %v921 = vsub.f32 %v913, %v909
        %v922 = vmul.f32 %v918, 10.0
        %v923 = vmul.f32 %v919, 10.0
        %v924 = vmul.f32 %v920, 10.0
        %v925 = vmul.f32 %v921, 10.0
        %v930 = vrot.slane %v906, 6
        %v931 = vrot.slane %v930, 4
        %v932 = vrot.slane %v907, 6
        %v933 = vrot.slane %v932, 4
        %v934 = vrot.slane %v908, 6
        %v935 = vrot.slane %v934, 4
        %v936 = vrot.slane %v909, 6
        %v937 = vrot.slane %v936, 4
        %v942 = vrcp.pop %v931
        %v943 = vmul.f32 %v931, %v942
        %v944 = vsub.f32 1.0, %v943
        %v945 = vmul.f32 %v942, %v944
        %v946 = vadd.f32 %v942, %v945
        %vm947 = vweird.f32 %v931
        %vm948 = vweird.f32 %v942
        %vm949 = vmor %vm947, %vm948
        %v950 = vsel %vm949, %v942, %v946
        %v951 = vand.u32 2147483647, %v931
        %vm952 = vcmp.eq.f32.partialorder %v951, 8.507059e+37
        %v953 = vand.u32 %v931, 2147483648
        %v954 = vor.u32 1.1754944e-38, %v953
        %v955 = vsel %vm952, %v954, %v950
        %v956 = vmul.f32 %v922, %v955
        %v957 = vrcp.pop %v933
        %v958 = vmul.f32 %v933, %v957
        %v959 = vsub.f32 1.0, %v958
        %v960 = vmul.f32 %v957, %v959
        %v961 = vadd.f32 %v957, %v960
        %vm962 = vweird.f32 %v933
        %vm963 = vweird.f32 %v957
        %vm964 = vmor %vm962, %vm963
        %v965 = vsel %vm964, %v957, %v961
        %v966 = vand.u32 2147483647, %v933
        %vm967 = vcmp.eq.f32.partialorder %v966, 8.507059e+37
        %v968 = vand.u32 %v933, 2147483648
        %v969 = vor.u32 1.1754944e-38, %v968
        %v970 = vsel %vm967, %v969, %v965
        %v971 = vmul.f32 %v923, %v970
        %v972 = vrcp.pop %v935
        %v973 = vmul.f32 %v935, %v972
        %v974 = vsub.f32 1.0, %v973
        %v975 = vmul.f32 %v972, %v974
        %v976 = vadd.f32 %v972, %v975
        %vm977 = vweird.f32 %v935
        %vm978 = vweird.f32 %v972
        %vm979 = vmor %vm977, %vm978
        %v980 = vsel %vm979, %v972, %v976
        %v981 = vand.u32 2147483647, %v935
        %vm982 = vcmp.eq.f32.partialorder %v981, 8.507059e+37
        %v983 = vand.u32 %v935, 2147483648
        %v984 = vor.u32 1.1754944e-38, %v983
        %v985 = vsel %vm982, %v984, %v980
        %v986 = vmul.f32 %v924, %v985
        %v987 = vrcp.pop %v937
        %v988 = vmul.f32 %v937, %v987
        %v989 = vsub.f32 1.0, %v988
        %v990 = vmul.f32 %v987, %v989
        %v991 = vadd.f32 %v987, %v990
        %vm992 = vweird.f32 %v937
        %vm993 = vweird.f32 %v987
        %vm994 = vmor %vm992, %vm993
        %v995 = vsel %vm994, %v987, %v991
        %v996 = vand.u32 2147483647, %v937
        %vm997 = vcmp.eq.f32.partialorder %v996, 8.507059e+37
        %v998 = vand.u32 %v937, 2147483648
        %v999 = vor.u32 1.1754944e-38, %v998
        %v1000 = vsel %vm997, %v999, %v995
        %v1001 = vmul.f32 %v925, %v1000
        %v1002 = vrcp.pop %v906
        %v1003 = vmul.f32 %v906, %v1002
        %v1004 = vsub.f32 1.0, %v1003
        %v1005 = vmul.f32 %v1002, %v1004
        %v1006 = vadd.f32 %v1002, %v1005
        %vm1007 = vweird.f32 %v906
        %vm1008 = vweird.f32 %v1002
        %vm1009 = vmor %vm1007, %vm1008
        %v1010 = vsel %vm1009, %v1002, %v1006
        %v1011 = vand.u32 2147483647, %v906
        %vm1012 = vcmp.eq.f32.partialorder %v1011, 8.507059e+37
        %v1013 = vand.u32 %v906, 2147483648
        %v1014 = vor.u32 1.1754944e-38, %v1013
        %v1015 = vsel %vm1012, %v1014, %v1010
        %v1016 = vmul.f32 %v910, %v1015
        %v1017 = vrcp.pop %v907
        %v1018 = vmul.f32 %v907, %v1017
        %v1019 = vsub.f32 1.0, %v1018
        %v1020 = vmul.f32 %v1017, %v1019
        %v1021 = vadd.f32 %v1017, %v1020
        %vm1022 = vweird.f32 %v907
        %vm1023 = vweird.f32 %v1017
        %vm1024 = vmor %vm1022, %vm1023
        %v1025 = vsel %vm1024, %v1017, %v1021
        %v1026 = vand.u32 2147483647, %v907
        %vm1027 = vcmp.eq.f32.partialorder %v1026, 8.507059e+37
        %v1028 = vand.u32 %v907, 2147483648
        %v1029 = vor.u32 1.1754944e-38, %v1028
        %v1030 = vsel %vm1027, %v1029, %v1025
        %v1031 = vmul.f32 %v911, %v1030
        %v1032 = vrcp.pop %v908
        %v1033 = vmul.f32 %v908, %v1032
        %v1034 = vsub.f32 1.0, %v1033
        %v1035 = vmul.f32 %v1032, %v1034
        %v1036 = vadd.f32 %v1032, %v1035
        %vm1037 = vweird.f32 %v908
        %vm1038 = vweird.f32 %v1032
        %vm1039 = vmor %vm1037, %vm1038
        %v1040 = vsel %vm1039, %v1032, %v1036
        %v1041 = vand.u32 2147483647, %v908
        %vm1042 = vcmp.eq.f32.partialorder %v1041, 8.507059e+37
        %v1043 = vand.u32 %v908, 2147483648
        %v1044 = vor.u32 1.1754944e-38, %v1043
        %v1045 = vsel %vm1042, %v1044, %v1040
        %v1046 = vmul.f32 %v912, %v1045
        %v1047 = vrcp.pop %v909
        %v1048 = vmul.f32 %v909, %v1047
        %v1049 = vsub.f32 1.0, %v1048
        %v1050 = vmul.f32 %v1047, %v1049
        %v1051 = vadd.f32 %v1047, %v1050
        %vm1052 = vweird.f32 %v909
        %vm1053 = vweird.f32 %v1047
        %vm1054 = vmor %vm1052, %vm1053
        %v1055 = vsel %vm1054, %v1047, %v1051
        %v1056 = vand.u32 2147483647, %v909
        %vm1057 = vcmp.eq.f32.partialorder %v1056, 8.507059e+37
        %v1058 = vand.u32 %v909, 2147483648
        %v1059 = vor.u32 1.1754944e-38, %v1058
        %v1060 = vsel %vm1057, %v1059, %v1055
        %v1061 = vmul.f32 %v913, %v1060
        %v1062 = vlog2.pop %v1016
        %v1063 = vmul.f32 %v1062, 0.6931472
        %v1064 = vlog2.pop %v1031
        %v1065 = vmul.f32 %v1064, 0.6931472
        %v1066 = vlog2.pop %v1046
        %v1067 = vmul.f32 %v1066, 0.6931472
        %v1068 = vlog2.pop %v1061
        %v1069 = vmul.f32 %v1068, 0.6931472
        %v1070 = vmul.f32 %v1063, 5.0
        %v1071 = vmul.f32 %v1065, 5.0
        %v1072 = vmul.f32 %v1067, 5.0
        %v1073 = vmul.f32 %v1069, 5.0
        %1078 = vst [vmem:[#allocation1] ss:$2 sm:$0xff] %v956
        %s1079 = scalar_lea.vmem [#allocation1], 16
        %1080 = vst [vmem:[%s1079] ss:$2 sm:$0xff] %v971
        %s1081 = scalar_lea.vmem [#allocation1], 32
        %1082 = vst [vmem:[%s1081] ss:$2 sm:$0xff] %v986
        %s1083 = scalar_lea.vmem [#allocation1], 48
        %1084 = vst [vmem:[%s1083] ss:$2 sm:$0xff] %v1001
        %v1085 = vld.sshfl [vmem:[#allocation1] sm:$0xff pattern:$0x75316420]
        %v1086 = vld.sshfl [vmem:[#allocation1 + $0x8] sm:$0xff pattern:$0x75316420]
        %v1087 = vld.sshfl [vmem:[#allocation1 + $0x10] sm:$0xff pattern:$0x75316420]
        %v1088 = vld.sshfl [vmem:[#allocation1 + $0x18] sm:$0xff pattern:$0x75316420]
        %v1089 = vld.sshfl [vmem:[#allocation1 + $0x20] sm:$0xff pattern:$0x75316420]
        %v1090 = vld.sshfl [vmem:[#allocation1 + $0x28] sm:$0xff pattern:$0x75316420]
        %v1091 = vld.sshfl [vmem:[#allocation1 + $0x30] sm:$0xff pattern:$0x75316420]
        %v1092 = vld.sshfl [vmem:[#allocation1 + $0x38] sm:$0xff pattern:$0x75316420]
        %1105 = vst [vmem:[#allocation1] ss:$2 sm:$0xff] %v1070
        %s1106 = scalar_lea.vmem [#allocation1], 16
        %1107 = vst [vmem:[%s1106] ss:$2 sm:$0xff] %v1071
        %s1108 = scalar_lea.vmem [#allocation1], 32
        %1109 = vst [vmem:[%s1108] ss:$2 sm:$0xff] %v1072
        %s1110 = scalar_lea.vmem [#allocation1], 48
        %1111 = vst [vmem:[%s1110] ss:$2 sm:$0xff] %v1073
        %v1112 = vld.sshfl [vmem:[#allocation1] sm:$0xff pattern:$0x75316420]
        %v1113 = vld.sshfl [vmem:[#allocation1 + $0x8] sm:$0xff pattern:$0x75316420]
        %v1114 = vld.sshfl [vmem:[#allocation1 + $0x10] sm:$0xff pattern:$0x75316420]
        %v1115 = vld.sshfl [vmem:[#allocation1 + $0x18] sm:$0xff pattern:$0x75316420]
        %v1116 = vld.sshfl [vmem:[#allocation1 + $0x20] sm:$0xff pattern:$0x75316420]
        %v1117 = vld.sshfl [vmem:[#allocation1 + $0x28] sm:$0xff pattern:$0x75316420]
        %v1118 = vld.sshfl [vmem:[#allocation1 + $0x30] sm:$0xff pattern:$0x75316420]
        %v1119 = vld.sshfl [vmem:[#allocation1 + $0x38] sm:$0xff pattern:$0x75316420]
        %v1128 = vsel %vm893, %v1085, %v1112
        %v1129 = vsel %vm893, %v1086, %v1113
        %v1130 = vsel %vm893, %v1087, %v1114
        %v1131 = vsel %vm893, %v1088, %v1115
        %v1132 = vsel %vm893, %v1089, %v1116
        %v1133 = vsel %vm893, %v1090, %v1117
        %v1134 = vsel %vm893, %v1091, %v1118
        %v1135 = vsel %vm893, %v1092, %v1119
        %v1144 = vrot.slane %v1129, 4
        %v1145 = vrot.slane %v1131, 4
        %v1146 = vrot.slane %v1133, 4
        %v1147 = vrot.slane %v1135, 4
        %v1148 = vsel %vm901, %v1128, %v1144
        %v1149 = vsel %vm901, %v1130, %v1145
        %v1150 = vsel %vm901, %v1132, %v1146
        %v1151 = vsel %vm901, %v1134, %v1147
        %v1156 = vsub.f32 %v914, %v1148
        %v1157 = vsub.f32 %v915, %v1149
        %v1158 = vsub.f32 %v916, %v1150
        %v1159 = vsub.f32 %v917, %v1151
        %v1160 = vand.u32 2147483647, %v1156
        %v1161 = vand.u32 2147483647, %v1157
        %v1162 = vand.u32 2147483647, %v1158
        %v1163 = vand.u32 2147483647, %v1159
        %vm1164 = vcmp.lt.f32.partialorder %v1160, 1.0
        %vm1165 = vcmp.lt.f32.partialorder %v1161, 1.0
        %vm1166 = vcmp.lt.f32.partialorder %v1162, 1.0
        %vm1167 = vcmp.lt.f32.partialorder %v1163, 1.0
        %v1168 = vmul.f32 %v1160, 0.5
        %v1169 = vmul.f32 %v1161, 0.5
        %v1170 = vmul.f32 %v1162, 0.5
        %v1171 = vmul.f32 %v1163, 0.5
        %v1172 = vmul.f32 %v1168, %v1160
        %v1173 = vmul.f32 %v1169, %v1161
        %v1174 = vmul.f32 %v1170, %v1162
        %v1175 = vmul.f32 %v1171, %v1163
        %v1176 = vsub.f32 %v1160, 0.5
        %v1177 = vsub.f32 %v1161, 0.5
        %v1178 = vsub.f32 %v1162, 0.5
        %v1179 = vsub.f32 %v1163, 0.5
        %v1180 = vsel %vm1164, %v1172, %v1176
        %v1181 = vsel %vm1165, %v1173, %v1177
        %v1182 = vsel %vm1166, %v1174, %v1178
        %v1183 = vsel %vm1167, %v1175, %v1179
        %vm1184 = vcmp.gt.s32.totalorder %v528, 0
        %v1185 = vld [vmem:[#allocation3] sm:$0xff]
        %v1186 = vld [vmem:[#allocation3 + $0x8] sm:$0xff]
        %v1187 = vld [vmem:[#allocation3 + $0x10] sm:$0xff]
        %v1188 = vld [vmem:[#allocation3 + $0x18] sm:$0xff]
        %v1189 = vsel %vm1184, 1, 0
        %v1190 = vperm.slane %v1189, 0
        %v1191 = vperm.slane %v1189, 1
        %v1192 = vperm.slane %v1189, 2
        %v1193 = vperm.slane %v1189, 3
        %v1194 = vperm.slane %v1189, 4
        %v1195 = vperm.slane %v1189, 5
        %v1196 = vperm.slane %v1189, 6
        %v1197 = vperm.slane %v1189, 7
        %vm1198 = vcmp.eq.s32.totalorder %v1190, 1
        %vm1199 = vcmp.eq.s32.totalorder %v1191, 1
        %vm1200 = vcmp.eq.s32.totalorder %v1192, 1
        %vm1201 = vcmp.eq.s32.totalorder %v1193, 1
        %vm1202 = vcmp.eq.s32.totalorder %v1194, 1
        %vm1203 = vcmp.eq.s32.totalorder %v1195, 1
        %vm1204 = vcmp.eq.s32.totalorder %v1196, 1
        %vm1205 = vcmp.eq.s32.totalorder %v1197, 1
        %1210 = vst [vmem:[#allocation1] ss:$2 sm:$0xff] %v1180
        %s1211 = scalar_lea.vmem [#allocation1], 16
        %1212 = vst [vmem:[%s1211] ss:$2 sm:$0xff] %v1181
        %s1213 = scalar_lea.vmem [#allocation1], 32
        %1214 = vst [vmem:[%s1213] ss:$2 sm:$0xff] %v1182
        %s1215 = scalar_lea.vmem [#allocation1], 48
        %1216 = vst [vmem:[%s1215] ss:$2 sm:$0xff] %v1183
        %v1217 = vld.sshfl [vmem:[#allocation1] sm:$0xff pattern:$0x75316420]
        %v1218 = vld.sshfl [vmem:[#allocation1 + $0x8] sm:$0xff pattern:$0x75316420]
        %v1219 = vld.sshfl [vmem:[#allocation1 + $0x10] sm:$0xff pattern:$0x75316420]
        %v1220 = vld.sshfl [vmem:[#allocation1 + $0x18] sm:$0xff pattern:$0x75316420]
        %v1221 = vld.sshfl [vmem:[#allocation1 + $0x20] sm:$0xff pattern:$0x75316420]
        %v1222 = vld.sshfl [vmem:[#allocation1 + $0x28] sm:$0xff pattern:$0x75316420]
        %v1223 = vld.sshfl [vmem:[#allocation1 + $0x30] sm:$0xff pattern:$0x75316420]
        %v1224 = vld.sshfl [vmem:[#allocation1 + $0x38] sm:$0xff pattern:$0x75316420]
        %v1233 = vsel %vm1198, %v1217, 0.0
        %v1234 = vsel %vm1199, %v1218, 0.0
        %v1235 = vsel %vm1200, %v1219, 0.0
        %v1236 = vsel %vm1201, %v1220, 0.0
        %v1237 = vsel %vm1202, %v1221, 0.0
        %v1238 = vsel %vm1203, %v1222, 0.0
        %v1239 = vsel %vm1204, %v1223, 0.0
        %v1240 = vsel %vm1205, %v1224, 0.0
        %v1249 = vrot.slane %v1234, 4
        %v1250 = vrot.slane %v1236, 4
        %v1251 = vrot.slane %v1238, 4
        %v1252 = vrot.slane %v1240, 4
        %v1253 = vsel %vm901, %v1233, %v1249
        %v1254 = vsel %vm901, %v1235, %v1250
        %v1255 = vsel %vm901, %v1237, %v1251
        %v1256 = vsel %vm901, %v1239, %v1252
        %v1261 = vadd.f32 %v1185, %v1253
        %v1262 = vadd.f32 %v1186, %v1254
        %v1263 = vadd.f32 %v1187, %v1255
        %v1264 = vadd.f32 %v1188, %v1256
        %1265 = vst [vmem:[#allocation3] sm:$0xff] %v1261
        %1266 = vst [vmem:[#allocation3 + $0x8] sm:$0xff] %v1262
        %1267 = vst [vmem:[#allocation3 + $0x10] sm:$0xff] %v1263
        %1268 = vst [vmem:[#allocation3 + $0x18] sm:$0xff] %v1264
        %v1269 = vld [vmem:[#allocation4] sm:$0xff]
        %v1270 = vcvt.s32.f32 %v1189
        %v1271 = vadd.f32 %v1269, %v1270
        %1272 = vst [vmem:[#allocation4] sm:$0xff] %v1271
        // Predicated region
        $region69: #{tpu_custom_call.1} parent=43 // pred_check
          %p1273 = pneg %p510
        $region70: #{tpu_custom_call.1} parent=43 // pred_check_branch
          %1275 = sbr.rel (%p1273) target = $region72
        $region71: #{tpu_custom_call.1} parent=43 // pred_region
          %v1276 = vld [vmem:[#allocation2] sm:$0xff]
          %v1278 = vperm.slane %v1276, 0
          %v1279 = vperm.slane %v1276, 1
          %v1280 = vperm.slane %v1276, 2
          %v1281 = vperm.slane %v1276, 3
          %v1282 = vperm.slane %v1276, 4
          %v1283 = vperm.slane %v1276, 5
          %v1284 = vperm.slane %v1276, 6
          %v1285 = vperm.slane %v1276, 7
          %v1294 = vsel %vm889, %v1278, 0.0
          %v1295 = vsel %vm889, %v1279, 0.0
          %v1296 = vadd.f32 %v1294, %v1295
          %v1297 = vsel %vm889, %v1280, 0.0
          %v1298 = vadd.f32 %v1296, %v1297
          %v1299 = vsel %vm889, %v1281, 0.0
          %v1300 = vadd.f32 %v1298, %v1299
          %v1301 = vsel %vm889, %v1282, 0.0
          %v1302 = vadd.f32 %v1300, %v1301
          %v1303 = vsel %vm889, %v1283, 0.0
          %v1304 = vadd.f32 %v1302, %v1303
          %v1305 = vsel %vm889, %v1284, 0.0
          %v1306 = vadd.f32 %v1304, %v1305
          %v1307 = vsel %vm889, %v1285, 0.0
          %v1308 = vadd.f32 %v1306, %v1307
          %1309 = vadd.xlane.f32.xlu0 %v1308
          %v1310 = vpop.xlane.xlu0 %1309
          %v1311 = vrot.slane %v1310, 4
          %v1312 = vadd.f32 %v1310, %v1311
          %v1313 = vrot.slane %v1312, 2
          %v1314 = vadd.f32 %v1312, %v1313
          %v1315 = vrot.slane %v1314, 1
          %v1316 = vadd.f32 %v1314, %v1315
          %s1317 = vtos %v1316
          %v1318 = vstv %s1317
          %vm1319 = vcmask 0
          %1320 = vst.msk [vmem:[%s503] sm:$0x1] %vm1319, %v1318
          %v1321 = vld [vmem:[#allocation3] sm:$0xff]
          %v1322 = vld [vmem:[#allocation3 + $0x8] sm:$0xff]
          %v1323 = vld [vmem:[#allocation3 + $0x10] sm:$0xff]
          %v1324 = vld [vmem:[#allocation3 + $0x18] sm:$0xff]
          %1329 = vst [vmem:[#allocation1] ss:$2 sm:$0xff] %v1321
          %s1330 = scalar_lea.vmem [#allocation1], 16
          %1331 = vst [vmem:[%s1330] ss:$2 sm:$0xff] %v1322
          %s1332 = scalar_lea.vmem [#allocation1], 32
          %1333 = vst [vmem:[%s1332] ss:$2 sm:$0xff] %v1323
          %s1334 = scalar_lea.vmem [#allocation1], 48
          %1335 = vst [vmem:[%s1334] ss:$2 sm:$0xff] %v1324
          %v1336 = vld.sshfl [vmem:[#allocation1] sm:$0xff pattern:$0x75316420]
          %v1337 = vld.sshfl [vmem:[#allocation1 + $0x8] sm:$0xff pattern:$0x75316420]
          %v1338 = vld.sshfl [vmem:[#allocation1 + $0x10] sm:$0xff pattern:$0x75316420]
          %v1339 = vld.sshfl [vmem:[#allocation1 + $0x18] sm:$0xff pattern:$0x75316420]
          %v1340 = vld.sshfl [vmem:[#allocation1 + $0x20] sm:$0xff pattern:$0x75316420]
          %v1341 = vld.sshfl [vmem:[#allocation1 + $0x28] sm:$0xff pattern:$0x75316420]
          %v1342 = vld.sshfl [vmem:[#allocation1 + $0x30] sm:$0xff pattern:$0x75316420]
          %v1343 = vld.sshfl [vmem:[#allocation1 + $0x38] sm:$0xff pattern:$0x75316420]
          %v1352 = vsel %vm901, %v1336, 0.0
          %v1353 = vsel %vm901, %v1337, 0.0
          %v1354 = vadd.f32 %v1352, %v1353
          %v1355 = vsel %vm901, %v1338, 0.0
          %v1356 = vadd.f32 %v1354, %v1355
          %v1357 = vsel %vm901, %v1339, 0.0
          %v1358 = vadd.f32 %v1356, %v1357
          %v1359 = vsel %vm901, %v1340, 0.0
          %v1360 = vadd.f32 %v1358, %v1359
          %v1361 = vsel %vm901, %v1341, 0.0
          %v1362 = vadd.f32 %v1360, %v1361
          %v1363 = vsel %vm901, %v1342, 0.0
          %v1364 = vadd.f32 %v1362, %v1363
          %v1365 = vsel %vm901, %v1343, 0.0
          %v1366 = vadd.f32 %v1364, %v1365
          %1367 = vadd.xlane.f32.xlu0 %v1366
          %v1368 = vpop.xlane.xlu0 %1367
          %v1369 = vrot.slane %v1368, 4
          %v1370 = vadd.f32 %v1368, %v1369
          %v1371 = vrot.slane %v1370, 2
          %v1372 = vadd.f32 %v1370, %v1371
          %v1373 = vrot.slane %v1372, 1
          %v1374 = vadd.f32 %v1372, %v1373
          %s1375 = vtos %v1374
          %v1376 = vstv %s1375
          %1377 = vst.msk [vmem:[%s506] sm:$0x1] %vm1319, %v1376
          %v1378 = vld [vmem:[#allocation4] sm:$0xff]
          %v1380 = vperm.slane %v1378, 0
          %v1381 = vperm.slane %v1378, 1
          %v1382 = vperm.slane %v1378, 2
          %v1383 = vperm.slane %v1378, 3
          %v1384 = vperm.slane %v1378, 4
          %v1385 = vperm.slane %v1378, 5
          %v1386 = vperm.slane %v1378, 6
          %v1387 = vperm.slane %v1378, 7
          %v1396 = vsel %vm889, %v1380, 0.0
          %v1397 = vsel %vm889, %v1381, 0.0
          %v1398 = vadd.f32 %v1396, %v1397
          %v1399 = vsel %vm889, %v1382, 0.0
          %v1400 = vadd.f32 %v1398, %v1399
          %v1401 = vsel %vm889, %v1383, 0.0
          %v1402 = vadd.f32 %v1400, %v1401
          %v1403 = vsel %vm889, %v1384, 0.0
          %v1404 = vadd.f32 %v1402, %v1403
          %v1405 = vsel %vm889, %v1385, 0.0
          %v1406 = vadd.f32 %v1404, %v1405
          %v1407 = vsel %vm889, %v1386, 0.0
          %v1408 = vadd.f32 %v1406, %v1407
          %v1409 = vsel %vm889, %v1387, 0.0
          %v1410 = vadd.f32 %v1408, %v1409
          %1411 = vadd.xlane.f32.xlu0 %v1410
          %v1412 = vpop.xlane.xlu0 %1411
          %v1413 = vrot.slane %v1412, 4
          %v1414 = vadd.f32 %v1412, %v1413
          %v1415 = vrot.slane %v1414, 2
          %v1416 = vadd.f32 %v1414, %v1415
          %v1417 = vrot.slane %v1416, 1
          %v1418 = vadd.f32 %v1416, %v1417
          %s1419 = vtos %v1418
          %v1420 = vstv %s1419
          %1421 = vst.msk [vmem:[%s509] sm:$0x1] %vm1319, %v1420
        $region72: #{tpu_custom_call.1} parent=43 // pred_fallthru
          _
        %p1422 = scmp.lt.s32.totalorder %s33, 1
        %s1423 = scalar_select %p1422, %s33, 1
        %s1424 = scalar_lea.vmem %s6, %s1423
        %p1425 = scmp.lt.s32.totalorder %s33, 1
        %s1426 = scalar_select %p1425, %s33, 1
        %s1427 = scalar_lea.vmem %s7, %s1426
        %p1428 = scmp.lt.s32.totalorder %s33, 1
        %s1429 = scalar_select %p1428, %s33, 1
        %s1430 = scalar_lea.vmem %s8, %s1429
        // Predicated region
        $region73: #{tpu_custom_call.1} parent=43 // pred_check
          %p1431 = pneg %p218
        $region74: #{tpu_custom_call.1} parent=43 // pred_check_branch
          %1433 = sbr.rel (%p1431) target = $region76
        $region75: #{tpu_custom_call.1} parent=43 // pred_region
          _
        $region76: #{tpu_custom_call.1} parent=43 // pred_fallthru
          _
        // Predicated region
        $region77: #{tpu_custom_call.1} parent=43 // pred_check
          %p1434 = pneg %p244
        $region78: #{tpu_custom_call.1} parent=43 // pred_check_branch
          %1436 = sbr.rel (%p1434) target = $region80
        $region79: #{tpu_custom_call.1} parent=43 // pred_region
          _
        $region80: #{tpu_custom_call.1} parent=43 // pred_fallthru
          _
        // Predicated region
        $region81: #{tpu_custom_call.1} parent=43 // pred_check
          %p1437 = pneg %p270
        $region82: #{tpu_custom_call.1} parent=43 // pred_check_branch
          %1439 = sbr.rel (%p1437) target = $region84
        $region83: #{tpu_custom_call.1} parent=43 // pred_region
          _
        $region84: #{tpu_custom_call.1} parent=43 // pred_fallthru
          _
      $region44: #{tpu_custom_call.1} parent=5 // pred_fallthru
        _
      %p1440 = scmp.le.s32.totalorder 2, %s24
      // Predicated region
      $region85: #{tpu_custom_call.1} parent=5 // pred_check
        %p1441 = pneg %p1440
      $region86: #{tpu_custom_call.1} parent=5 // pred_check_branch
        %1443 = sbr.rel (%p1441) target = $region88
      $region87: #{tpu_custom_call.1} parent=5 // pred_region
        %s1444 = ssub.s32 %s24, 2
        // Predicated region
        $region89: #{tpu_custom_call.1} parent=87 // pred_check
          %p1445 = pneg %p224
        $region90: #{tpu_custom_call.1} parent=87 // pred_check_branch
          %1447 = sbr.rel (%p1445) target = $region92
        $region91: #{tpu_custom_call.1} parent=87 // pred_region
          %p1448 = scmp.lt.s32.totalorder %s35, 1
          %s1449 = scalar_select %p1448, %s35, 1
          %s1450 = scalar_lea.vmem %s6, %s1449
        $region92: #{tpu_custom_call.1} parent=87 // pred_fallthru
          _
        // Predicated region
        $region93: #{tpu_custom_call.1} parent=87 // pred_check
          %p1451 = pneg %p250
        $region94: #{tpu_custom_call.1} parent=87 // pred_check_branch
          %1453 = sbr.rel (%p1451) target = $region96
        $region95: #{tpu_custom_call.1} parent=87 // pred_region
          %p1454 = scmp.lt.s32.totalorder %s35, 1
          %s1455 = scalar_select %p1454, %s35, 1
          %s1456 = scalar_lea.vmem %s7, %s1455
        $region96: #{tpu_custom_call.1} parent=87 // pred_fallthru
          _
        // Predicated region
        $region97: #{tpu_custom_call.1} parent=87 // pred_check
          %p1457 = pneg %p276
        $region98: #{tpu_custom_call.1} parent=87 // pred_check_branch
          %1459 = sbr.rel (%p1457) target = $region100
        $region99: #{tpu_custom_call.1} parent=87 // pred_region
          %p1460 = scmp.lt.s32.totalorder %s35, 1
          %s1461 = scalar_select %p1460, %s35, 1
          %s1462 = scalar_lea.vmem %s8, %s1461
        $region100: #{tpu_custom_call.1} parent=87 // pred_fallthru
          _
      $region88: #{tpu_custom_call.1} parent=5 // pred_fallthru
        _
    $region6: #{tpu_custom_call.1} parent=1 // loop_footer
      %s28 = sadd.s32 1, %s24
    $region7: #{tpu_custom_call.1} parent=1 // loop_footer_branch
      %23 = sbr.rel target = $region3
    $region8: #{tpu_custom_call.1} parent=1 // loop_exit
      _
    %1463 = vsyncpa [#allocation6], 1
    %s1464 = scalar_lea.sflag [#allocation6], 1
    %1465 = vsyncpa %s1464, 1
    %1466 = vsyncpa [#allocation8], 1
    %s1467 = scalar_lea.sflag [#allocation8], 1
    %1468 = vsyncpa %s1467, 1
    %1469 = vsyncpa [#allocation11], 1
    %s1470 = scalar_lea.sflag [#allocation11], 1
    %1471 = vsyncpa %s1470, 1

</llo_original>
